<compile_context>
chip_gen: v5e
topology: v5e:2x2
jax: 0.10.0
libtpu: 0.0.40
codegen_flags: <defaults>
</compile_context>

<pallas_src>
import jax
import jax.numpy as jnp
from jax.experimental import pallas as pl
from jax.experimental.pallas import tpu as pltpu


def _round_up(x, m):
    return (x + m - 1) // m * m


def _line_kernel(vi_sref, vj_sref, first_hbm, second_hbm, context_hbm,
                 out_ref, buf_i, buf_j, sem):
    # vi_sref / vj_sref : SMEM int32 refs, shape (B_pad,)
    # first/second/context_hbm : (N, D) tables left in HBM (pl.ANY)
    # out_ref : (2, TB) lane-dense output block (row 0 = first order,
    #           row 1 = second order; batch on the lane axis)
    # buf_i   : VMEM (2, TB, D)  -> [first_emb[v_i], second_emb[v_i]]
    # buf_j   : VMEM (2, TB, D)  -> [first_emb[v_j], context_emb[v_j]]
    # sem     : DMA semaphores, shape (4, TB), one per in-flight copy
    b = pl.program_id(0)
    tb = buf_i.shape[1]
    base = b * tb

    def issue(r, carry):
        vi = vi_sref[base + r]
        vj = vj_sref[base + r]
        pltpu.make_async_copy(first_hbm.at[pl.ds(vi, 1)],
                              buf_i.at[0, pl.ds(r, 1)], sem.at[0, r]).start()
        pltpu.make_async_copy(second_hbm.at[pl.ds(vi, 1)],
                              buf_i.at[1, pl.ds(r, 1)], sem.at[1, r]).start()
        pltpu.make_async_copy(first_hbm.at[pl.ds(vj, 1)],
                              buf_j.at[0, pl.ds(r, 1)], sem.at[2, r]).start()
        pltpu.make_async_copy(context_hbm.at[pl.ds(vj, 1)],
                              buf_j.at[1, pl.ds(r, 1)], sem.at[3, r]).start()
        return carry

    def drain(r, carry):
        # Only sizes + semaphore matter for wait(); use row 0 as dummy src.
        pltpu.make_async_copy(first_hbm.at[pl.ds(0, 1)],
                              buf_i.at[0, pl.ds(r, 1)], sem.at[0, r]).wait()
        pltpu.make_async_copy(second_hbm.at[pl.ds(0, 1)],
                              buf_i.at[1, pl.ds(r, 1)], sem.at[1, r]).wait()
        pltpu.make_async_copy(first_hbm.at[pl.ds(0, 1)],
                              buf_j.at[0, pl.ds(r, 1)], sem.at[2, r]).wait()
        pltpu.make_async_copy(context_hbm.at[pl.ds(0, 1)],
                              buf_j.at[1, pl.ds(r, 1)], sem.at[3, r]).wait()
        return carry

    unroll = True if tb <= 64 else 8
    jax.lax.fori_loop(0, tb, issue, 0, unroll=unroll)
    jax.lax.fori_loop(0, tb, drain, 0, unroll=unroll)

    # One elementwise multiply + ONE lane reduction produces both scores.
    prod = buf_i[...] * buf_j[...]            # (2, TB, D) f32
    out_ref[...] = jnp.sum(prod, axis=-1)     # (2, TB) lane-dense store


def node_embedding_forward(v_i, v_j, first_emb, second_emb, context_emb,
                           order='first', block_rows=256,
                           xla_fallback_max_batch=0):
    """Pallas implementation of NodeEmbeddingModel.forward (LINE)."""
    assert v_i.ndim == 1 and v_j.ndim == 1 and v_i.shape == v_j.shape
    assert first_emb.shape == second_emb.shape == context_emb.shape
    B = v_i.shape[0]
    N, D = first_emb.shape

    # Optional XLA fast path for tiny batches (disabled by default so the
    # Pallas kernel is always exercised).
    if B <= xla_fallback_max_batch:
        return _reference(v_i, v_j, first_emb, second_emb, context_emb, order)

    v_i = v_i.astype(jnp.int32)
    v_j = v_j.astype(jnp.int32)
    first_emb = first_emb.astype(jnp.float32)
    second_emb = second_emb.astype(jnp.float32)
    context_emb = context_emb.astype(jnp.float32)

    # Tile size: multiple of 8 (f32 sublanes).  When there is more than one
    # block, the output lane dim must be a multiple of 128.
    if B <= block_rows:
        tb = _round_up(max(B, 1), 8)
    else:
        tb = _round_up(block_rows, 128)
    b_pad = _round_up(B, tb)
    num_blocks = b_pad // tb

    pad = b_pad - B
    v_i_p = jnp.pad(v_i, (0, pad))     # pad with index 0 (always valid)
    v_j_p = jnp.pad(v_j, (0, pad))

    grid_spec = pltpu.PrefetchScalarGridSpec(
        num_scalar_prefetch=2,
        grid=(num_blocks,),
        in_specs=[
            pl.BlockSpec(memory_space=pl.ANY),   # first_emb  (HBM)
            pl.BlockSpec(memory_space=pl.ANY),   # second_emb (HBM)
            pl.BlockSpec(memory_space=pl.ANY),   # context_emb (HBM)
        ],
        out_specs=pl.BlockSpec((2, tb), lambda i, vi, vj: (0, i)),
        scratch_shapes=[
            pltpu.VMEM((2, tb, D), jnp.float32),      # buf_i
            pltpu.VMEM((2, tb, D), jnp.float32),      # buf_j
            pltpu.SemaphoreType.DMA((4, tb)),         # one sem per copy
        ],
    )

    cost = pl.CostEstimate(
        flops=4 * B * D,
        transcendentals=0,
        bytes_accessed=4 * B * D * 4 + 2 * B * 4 + 2 * B * 4,
    )

    out = pl.pallas_call(
        _line_kernel,
        out_shape=jax.ShapeDtypeStruct((2, b_pad), jnp.float32),
        grid_spec=grid_spec,
        compiler_params=pltpu.CompilerParams(
            dimension_semantics=("parallel",)),
        cost_estimate=cost,
    )(v_i_p, v_j_p, first_emb, second_emb, context_emb)

    pair = out[:, :B].T                # (B, 2): col 0 = first, col 1 = second
    if order == 'first':
        return pair[:, 0:1]
    elif order == 'second':
        return pair[:, 1:2]
    return pair


def _reference(v_i, v_j, first_emb, second_emb, context_emb, order):
    v_i_emb = first_emb[v_i]
    v_j_emb = first_emb[v_j]
    v_i_emb_second = second_emb[v_i]
    v_j_context_emb = context_emb[v_j]
    first_order = jnp.sum(v_i_emb * v_j_emb, axis=-1, keepdims=True)
    second_order = jnp.sum(v_i_emb_second * v_j_context_emb, axis=-1,
                           keepdims=True)
    if order == 'first':
        return first_order
    elif order == 'second':
        return second_order
    return jnp.concatenate((first_order, second_order), axis=-1)


if __name__ == "__main__":
    num_nodes = 64
    embedding_size = 128
    batch = 8

    key = jax.random.PRNGKey(0)
    k1, k2, k3, k4, k5 = jax.random.split(key, 5)

    # nn.Embedding default init: N(0, 1)
    first_emb = jax.random.normal(k1, (num_nodes, embedding_size), jnp.float32)
    second_emb = jax.random.normal(k2, (num_nodes, embedding_size), jnp.float32)
    context_emb = jax.random.normal(k3, (num_nodes, embedding_size), jnp.float32)

    v_i = jax.random.randint(k4, (batch,), 0, num_nodes, dtype=jnp.int32)
    v_j = jax.random.randint(k5, (batch,), 0, num_nodes, dtype=jnp.int32)

    ok = True
    for order in ("first", "second", "all"):
        out = node_embedding_forward(v_i, v_j, first_emb, second_emb,
                                     context_emb, order=order)
        out = jax.block_until_ready(out)
        ref = _reference(v_i, v_j, first_emb, second_emb, context_emb, order)
        if not jnp.allclose(out, ref, rtol=1e-5, atol=1e-5):
            ok = False
            print(f"MISMATCH for order={order}")

    if ok:
        print("KERNEL_OK")
</pallas_src>

<mosaic_0001>
module attributes {stable_mosaic.version = 11 : i64} {
  func.func @_line_kernel(%arg0: i32, %arg1: memref<8xi32, #tpu.memory_space<smem>>, %arg2: memref<8xi32, #tpu.memory_space<smem>>, %arg3: memref<64x128xf32, #tpu.memory_space<any>>, %arg4: memref<64x128xf32, #tpu.memory_space<any>>, %arg5: memref<64x128xf32, #tpu.memory_space<any>>, %arg6: memref<2x8xf32, #tpu.memory_space<vmem>>, %arg7: memref<2x8x128xf32, #tpu.memory_space<vmem>>, %arg8: memref<2x8x128xf32, #tpu.memory_space<vmem>>, %arg9: memref<4x8x!tpu.dma_semaphore, #tpu.memory_space<semaphore_mem>>) attributes {dimension_semantics = [#tpu.dimension_semantics<parallel>], iteration_bounds = array<i64: 1>, scalar_prefetch = 2 : i64, scratch_operands = 3 : i64, tpu.core_type = #tpu.core_type<tc>, window_params = [{}, {}, {}, {transform_indices = @transform_3, window_bounds = array<i64: 2, 8>}]} {
    %c8_i32 = arith.constant 8 : i32
    %0 = arith.muli %arg0, %c8_i32 : i32
    %c0_i32 = arith.constant 0 : i32
    %1 = arith.addi %0, %c0_i32 : i32
    %2 = arith.index_cast %1 : i32 to index
    %3 = memref.load %arg1[%2] : memref<8xi32, #tpu.memory_space<smem>>
    %4 = arith.addi %0, %c0_i32 : i32
    %5 = arith.index_cast %4 : i32 to index
    %6 = memref.load %arg2[%5] : memref<8xi32, #tpu.memory_space<smem>>
    %c0_i32_0 = arith.constant 0 : i32
    %c0_i32_1 = arith.constant 0 : i32
    %c0_i32_2 = arith.constant 0 : i32
    %7 = tpu.memref_slice %arg3[%3, %c0_i32_2] : memref<64x128xf32, #tpu.memory_space<any>> -> memref<1x128xf32, #tpu.memory_space<any>>
    %c0_i32_3 = arith.constant 0 : i32
    %8 = tpu.memref_slice %arg7[%c0_i32_0, %c0_i32, %c0_i32_3] : memref<2x8x128xf32, #tpu.memory_space<vmem>> -> memref<1x1x128xf32, #tpu.memory_space<vmem>>
    %9 = tpu.memref_squeeze %8 : memref<1x1x128xf32, #tpu.memory_space<vmem>> -> memref<1x128xf32, #tpu.memory_space<vmem>>
    %10 = tpu.memref_slice %arg9[%c0_i32_1, %c0_i32] : memref<4x8x!tpu.dma_semaphore, #tpu.memory_space<semaphore_mem>> -> memref<1x1x!tpu.dma_semaphore, #tpu.memory_space<semaphore_mem>>
    %11 = tpu.memref_squeeze %10 : memref<1x1x!tpu.dma_semaphore, #tpu.memory_space<semaphore_mem>> -> memref<!tpu.dma_semaphore, #tpu.memory_space<semaphore_mem>>
    tpu.enqueue_dma source(%7 : memref<1x128xf32, #tpu.memory_space<any>>) target(%9 : memref<1x128xf32, #tpu.memory_space<vmem>>) target_semaphore(%11 : memref<!tpu.dma_semaphore, #tpu.memory_space<semaphore_mem>>)
    %c1_i32 = arith.constant 1 : i32
    %c1_i32_4 = arith.constant 1 : i32
    %c0_i32_5 = arith.constant 0 : i32
    %12 = tpu.memref_slice %arg4[%3, %c0_i32_5] : memref<64x128xf32, #tpu.memory_space<any>> -> memref<1x128xf32, #tpu.memory_space<any>>
    %c0_i32_6 = arith.constant 0 : i32
    %13 = tpu.memref_slice %arg7[%c1_i32, %c0_i32, %c0_i32_6] : memref<2x8x128xf32, #tpu.memory_space<vmem>> -> memref<1x1x128xf32, #tpu.memory_space<vmem>>
    %14 = tpu.memref_squeeze %13 : memref<1x1x128xf32, #tpu.memory_space<vmem>> -> memref<1x128xf32, #tpu.memory_space<vmem>>
    %15 = tpu.memref_slice %arg9[%c1_i32_4, %c0_i32] : memref<4x8x!tpu.dma_semaphore, #tpu.memory_space<semaphore_mem>> -> memref<1x1x!tpu.dma_semaphore, #tpu.memory_space<semaphore_mem>>
    %16 = tpu.memref_squeeze %15 : memref<1x1x!tpu.dma_semaphore, #tpu.memory_space<semaphore_mem>> -> memref<!tpu.dma_semaphore, #tpu.memory_space<semaphore_mem>>
    tpu.enqueue_dma source(%12 : memref<1x128xf32, #tpu.memory_space<any>>) target(%14 : memref<1x128xf32, #tpu.memory_space<vmem>>) target_semaphore(%16 : memref<!tpu.dma_semaphore, #tpu.memory_space<semaphore_mem>>)
    %c0_i32_7 = arith.constant 0 : i32
    %c2_i32 = arith.constant 2 : i32
    %c0_i32_8 = arith.constant 0 : i32
    %17 = tpu.memref_slice %arg3[%6, %c0_i32_8] : memref<64x128xf32, #tpu.memory_space<any>> -> memref<1x128xf32, #tpu.memory_space<any>>
    %c0_i32_9 = arith.constant 0 : i32
    %18 = tpu.memref_slice %arg8[%c0_i32_7, %c0_i32, %c0_i32_9] : memref<2x8x128xf32, #tpu.memory_space<vmem>> -> memref<1x1x128xf32, #tpu.memory_space<vmem>>
    %19 = tpu.memref_squeeze %18 : memref<1x1x128xf32, #tpu.memory_space<vmem>> -> memref<1x128xf32, #tpu.memory_space<vmem>>
    %20 = tpu.memref_slice %arg9[%c2_i32, %c0_i32] : memref<4x8x!tpu.dma_semaphore, #tpu.memory_space<semaphore_mem>> -> memref<1x1x!tpu.dma_semaphore, #tpu.memory_space<semaphore_mem>>
    %21 = tpu.memref_squeeze %20 : memref<1x1x!tpu.dma_semaphore, #tpu.memory_space<semaphore_mem>> -> memref<!tpu.dma_semaphore, #tpu.memory_space<semaphore_mem>>
    tpu.enqueue_dma source(%17 : memref<1x128xf32, #tpu.memory_space<any>>) target(%19 : memref<1x128xf32, #tpu.memory_space<vmem>>) target_semaphore(%21 : memref<!tpu.dma_semaphore, #tpu.memory_space<semaphore_mem>>)
    %c1_i32_10 = arith.constant 1 : i32
    %c3_i32 = arith.constant 3 : i32
    %c0_i32_11 = arith.constant 0 : i32
    %22 = tpu.memref_slice %arg5[%6, %c0_i32_11] : memref<64x128xf32, #tpu.memory_space<any>> -> memref<1x128xf32, #tpu.memory_space<any>>
    %c0_i32_12 = arith.constant 0 : i32
    %23 = tpu.memref_slice %arg8[%c1_i32_10, %c0_i32, %c0_i32_12] : memref<2x8x128xf32, #tpu.memory_space<vmem>> -> memref<1x1x128xf32, #tpu.memory_space<vmem>>
    %24 = tpu.memref_squeeze %23 : memref<1x1x128xf32, #tpu.memory_space<vmem>> -> memref<1x128xf32, #tpu.memory_space<vmem>>
    %25 = tpu.memref_slice %arg9[%c3_i32, %c0_i32] : memref<4x8x!tpu.dma_semaphore, #tpu.memory_space<semaphore_mem>> -> memref<1x1x!tpu.dma_semaphore, #tpu.memory_space<semaphore_mem>>
    %26 = tpu.memref_squeeze %25 : memref<1x1x!tpu.dma_semaphore, #tpu.memory_space<semaphore_mem>> -> memref<!tpu.dma_semaphore, #tpu.memory_space<semaphore_mem>>
    tpu.enqueue_dma source(%22 : memref<1x128xf32, #tpu.memory_space<any>>) target(%24 : memref<1x128xf32, #tpu.memory_space<vmem>>) target_semaphore(%26 : memref<!tpu.dma_semaphore, #tpu.memory_space<semaphore_mem>>)
    %c1_i32_13 = arith.constant 1 : i32
    %27 = arith.addi %0, %c1_i32_13 : i32
    %28 = arith.index_cast %27 : i32 to index
    %29 = memref.load %arg1[%28] : memref<8xi32, #tpu.memory_space<smem>>
    %30 = arith.addi %0, %c1_i32_13 : i32
    %31 = arith.index_cast %30 : i32 to index
    %32 = memref.load %arg2[%31] : memref<8xi32, #tpu.memory_space<smem>>
    %c0_i32_14 = arith.constant 0 : i32
    %c0_i32_15 = arith.constant 0 : i32
    %c0_i32_16 = arith.constant 0 : i32
    %33 = tpu.memref_slice %arg3[%29, %c0_i32_16] : memref<64x128xf32, #tpu.memory_space<any>> -> memref<1x128xf32, #tpu.memory_space<any>>
    %c0_i32_17 = arith.constant 0 : i32
    %34 = tpu.memref_slice %arg7[%c0_i32_14, %c1_i32_13, %c0_i32_17] : memref<2x8x128xf32, #tpu.memory_space<vmem>> -> memref<1x1x128xf32, #tpu.memory_space<vmem>>
    %35 = tpu.memref_squeeze %34 : memref<1x1x128xf32, #tpu.memory_space<vmem>> -> memref<1x128xf32, #tpu.memory_space<vmem>>
    %36 = tpu.memref_slice %arg9[%c0_i32_15, %c1_i32_13] : memref<4x8x!tpu.dma_semaphore, #tpu.memory_space<semaphore_mem>> -> memref<1x1x!tpu.dma_semaphore, #tpu.memory_space<semaphore_mem>>
    %37 = tpu.memref_squeeze %36 : memref<1x1x!tpu.dma_semaphore, #tpu.memory_space<semaphore_mem>> -> memref<!tpu.dma_semaphore, #tpu.memory_space<semaphore_mem>>
    tpu.enqueue_dma source(%33 : memref<1x128xf32, #tpu.memory_space<any>>) target(%35 : memref<1x128xf32, #tpu.memory_space<vmem>>) target_semaphore(%37 : memref<!tpu.dma_semaphore, #tpu.memory_space<semaphore_mem>>)
    %c1_i32_18 = arith.constant 1 : i32
    %c1_i32_19 = arith.constant 1 : i32
    %c0_i32_20 = arith.constant 0 : i32
    %38 = tpu.memref_slice %arg4[%29, %c0_i32_20] : memref<64x128xf32, #tpu.memory_space<any>> -> memref<1x128xf32, #tpu.memory_space<any>>
    %c0_i32_21 = arith.constant 0 : i32
    %39 = tpu.memref_slice %arg7[%c1_i32_18, %c1_i32_13, %c0_i32_21] : memref<2x8x128xf32, #tpu.memory_space<vmem>> -> memref<1x1x128xf32, #tpu.memory_space<vmem>>
    %40 = tpu.memref_squeeze %39 : memref<1x1x128xf32, #tpu.memory_space<vmem>> -> memref<1x128xf32, #tpu.memory_space<vmem>>
    %41 = tpu.memref_slice %arg9[%c1_i32_19, %c1_i32_13] : memref<4x8x!tpu.dma_semaphore, #tpu.memory_space<semaphore_mem>> -> memref<1x1x!tpu.dma_semaphore, #tpu.memory_space<semaphore_mem>>
    %42 = tpu.memref_squeeze %41 : memref<1x1x!tpu.dma_semaphore, #tpu.memory_space<semaphore_mem>> -> memref<!tpu.dma_semaphore, #tpu.memory_space<semaphore_mem>>
    tpu.enqueue_dma source(%38 : memref<1x128xf32, #tpu.memory_space<any>>) target(%40 : memref<1x128xf32, #tpu.memory_space<vmem>>) target_semaphore(%42 : memref<!tpu.dma_semaphore, #tpu.memory_space<semaphore_mem>>)
    %c0_i32_22 = arith.constant 0 : i32
    %c2_i32_23 = arith.constant 2 : i32
    %c0_i32_24 = arith.constant 0 : i32
    %43 = tpu.memref_slice %arg3[%32, %c0_i32_24] : memref<64x128xf32, #tpu.memory_space<any>> -> memref<1x128xf32, #tpu.memory_space<any>>
    %c0_i32_25 = arith.constant 0 : i32
    %44 = tpu.memref_slice %arg8[%c0_i32_22, %c1_i32_13, %c0_i32_25] : memref<2x8x128xf32, #tpu.memory_space<vmem>> -> memref<1x1x128xf32, #tpu.memory_space<vmem>>
    %45 = tpu.memref_squeeze %44 : memref<1x1x128xf32, #tpu.memory_space<vmem>> -> memref<1x128xf32, #tpu.memory_space<vmem>>
    %46 = tpu.memref_slice %arg9[%c2_i32_23, %c1_i32_13] : memref<4x8x!tpu.dma_semaphore, #tpu.memory_space<semaphore_mem>> -> memref<1x1x!tpu.dma_semaphore, #tpu.memory_space<semaphore_mem>>
    %47 = tpu.memref_squeeze %46 : memref<1x1x!tpu.dma_semaphore, #tpu.memory_space<semaphore_mem>> -> memref<!tpu.dma_semaphore, #tpu.memory_space<semaphore_mem>>
    tpu.enqueue_dma source(%43 : memref<1x128xf32, #tpu.memory_space<any>>) target(%45 : memref<1x128xf32, #tpu.memory_space<vmem>>) target_semaphore(%47 : memref<!tpu.dma_semaphore, #tpu.memory_space<semaphore_mem>>)
    %c1_i32_26 = arith.constant 1 : i32
    %c3_i32_27 = arith.constant 3 : i32
    %c0_i32_28 = arith.constant 0 : i32
    %48 = tpu.memref_slice %arg5[%32, %c0_i32_28] : memref<64x128xf32, #tpu.memory_space<any>> -> memref<1x128xf32, #tpu.memory_space<any>>
    %c0_i32_29 = arith.constant 0 : i32
    %49 = tpu.memref_slice %arg8[%c1_i32_26, %c1_i32_13, %c0_i32_29] : memref<2x8x128xf32, #tpu.memory_space<vmem>> -> memref<1x1x128xf32, #tpu.memory_space<vmem>>
    %50 = tpu.memref_squeeze %49 : memref<1x1x128xf32, #tpu.memory_space<vmem>> -> memref<1x128xf32, #tpu.memory_space<vmem>>
    %51 = tpu.memref_slice %arg9[%c3_i32_27, %c1_i32_13] : memref<4x8x!tpu.dma_semaphore, #tpu.memory_space<semaphore_mem>> -> memref<1x1x!tpu.dma_semaphore, #tpu.memory_space<semaphore_mem>>
    %52 = tpu.memref_squeeze %51 : memref<1x1x!tpu.dma_semaphore, #tpu.memory_space<semaphore_mem>> -> memref<!tpu.dma_semaphore, #tpu.memory_space<semaphore_mem>>
    tpu.enqueue_dma source(%48 : memref<1x128xf32, #tpu.memory_space<any>>) target(%50 : memref<1x128xf32, #tpu.memory_space<vmem>>) target_semaphore(%52 : memref<!tpu.dma_semaphore, #tpu.memory_space<semaphore_mem>>)
    %c2_i32_30 = arith.constant 2 : i32
    %53 = arith.addi %0, %c2_i32_30 : i32
    %54 = arith.index_cast %53 : i32 to index
    %55 = memref.load %arg1[%54] : memref<8xi32, #tpu.memory_space<smem>>
    %56 = arith.addi %0, %c2_i32_30 : i32
    %57 = arith.index_cast %56 : i32 to index
    %58 = memref.load %arg2[%57] : memref<8xi32, #tpu.memory_space<smem>>
    %c0_i32_31 = arith.constant 0 : i32
    %c0_i32_32 = arith.constant 0 : i32
    %c0_i32_33 = arith.constant 0 : i32
    %59 = tpu.memref_slice %arg3[%55, %c0_i32_33] : memref<64x128xf32, #tpu.memory_space<any>> -> memref<1x128xf32, #tpu.memory_space<any>>
    %c0_i32_34 = arith.constant 0 : i32
    %60 = tpu.memref_slice %arg7[%c0_i32_31, %c2_i32_30, %c0_i32_34] : memref<2x8x128xf32, #tpu.memory_space<vmem>> -> memref<1x1x128xf32, #tpu.memory_space<vmem>>
    %61 = tpu.memref_squeeze %60 : memref<1x1x128xf32, #tpu.memory_space<vmem>> -> memref<1x128xf32, #tpu.memory_space<vmem>>
    %62 = tpu.memref_slice %arg9[%c0_i32_32, %c2_i32_30] : memref<4x8x!tpu.dma_semaphore, #tpu.memory_space<semaphore_mem>> -> memref<1x1x!tpu.dma_semaphore, #tpu.memory_space<semaphore_mem>>
    %63 = tpu.memref_squeeze %62 : memref<1x1x!tpu.dma_semaphore, #tpu.memory_space<semaphore_mem>> -> memref<!tpu.dma_semaphore, #tpu.memory_space<semaphore_mem>>
    tpu.enqueue_dma source(%59 : memref<1x128xf32, #tpu.memory_space<any>>) target(%61 : memref<1x128xf32, #tpu.memory_space<vmem>>) target_semaphore(%63 : memref<!tpu.dma_semaphore, #tpu.memory_space<semaphore_mem>>)
    %c1_i32_35 = arith.constant 1 : i32
    %c1_i32_36 = arith.constant 1 : i32
    %c0_i32_37 = arith.constant 0 : i32
    %64 = tpu.memref_slice %arg4[%55, %c0_i32_37] : memref<64x128xf32, #tpu.memory_space<any>> -> memref<1x128xf32, #tpu.memory_space<any>>
    %c0_i32_38 = arith.constant 0 : i32
    %65 = tpu.memref_slice %arg7[%c1_i32_35, %c2_i32_30, %c0_i32_38] : memref<2x8x128xf32, #tpu.memory_space<vmem>> -> memref<1x1x128xf32, #tpu.memory_space<vmem>>
    %66 = tpu.memref_squeeze %65 : memref<1x1x128xf32, #tpu.memory_space<vmem>> -> memref<1x128xf32, #tpu.memory_space<vmem>>
    %67 = tpu.memref_slice %arg9[%c1_i32_36, %c2_i32_30] : memref<4x8x!tpu.dma_semaphore, #tpu.memory_space<semaphore_mem>> -> memref<1x1x!tpu.dma_semaphore, #tpu.memory_space<semaphore_mem>>
    %68 = tpu.memref_squeeze %67 : memref<1x1x!tpu.dma_semaphore, #tpu.memory_space<semaphore_mem>> -> memref<!tpu.dma_semaphore, #tpu.memory_space<semaphore_mem>>
    tpu.enqueue_dma source(%64 : memref<1x128xf32, #tpu.memory_space<any>>) target(%66 : memref<1x128xf32, #tpu.memory_space<vmem>>) target_semaphore(%68 : memref<!tpu.dma_semaphore, #tpu.memory_space<semaphore_mem>>)
    %c0_i32_39 = arith.constant 0 : i32
    %c2_i32_40 = arith.constant 2 : i32
    %c0_i32_41 = arith.constant 0 : i32
    %69 = tpu.memref_slice %arg3[%58, %c0_i32_41] : memref<64x128xf32, #tpu.memory_space<any>> -> memref<1x128xf32, #tpu.memory_space<any>>
    %c0_i32_42 = arith.constant 0 : i32
    %70 = tpu.memref_slice %arg8[%c0_i32_39, %c2_i32_30, %c0_i32_42] : memref<2x8x128xf32, #tpu.memory_space<vmem>> -> memref<1x1x128xf32, #tpu.memory_space<vmem>>
    %71 = tpu.memref_squeeze %70 : memref<1x1x128xf32, #tpu.memory_space<vmem>> -> memref<1x128xf32, #tpu.memory_space<vmem>>
    %72 = tpu.memref_slice %arg9[%c2_i32_40, %c2_i32_30] : memref<4x8x!tpu.dma_semaphore, #tpu.memory_space<semaphore_mem>> -> memref<1x1x!tpu.dma_semaphore, #tpu.memory_space<semaphore_mem>>
    %73 = tpu.memref_squeeze %72 : memref<1x1x!tpu.dma_semaphore, #tpu.memory_space<semaphore_mem>> -> memref<!tpu.dma_semaphore, #tpu.memory_space<semaphore_mem>>
    tpu.enqueue_dma source(%69 : memref<1x128xf32, #tpu.memory_space<any>>) target(%71 : memref<1x128xf32, #tpu.memory_space<vmem>>) target_semaphore(%73 : memref<!tpu.dma_semaphore, #tpu.memory_space<semaphore_mem>>)
    %c1_i32_43 = arith.constant 1 : i32
    %c3_i32_44 = arith.constant 3 : i32
    %c0_i32_45 = arith.constant 0 : i32
    %74 = tpu.memref_slice %arg5[%58, %c0_i32_45] : memref<64x128xf32, #tpu.memory_space<any>> -> memref<1x128xf32, #tpu.memory_space<any>>
    %c0_i32_46 = arith.constant 0 : i32
    %75 = tpu.memref_slice %arg8[%c1_i32_43, %c2_i32_30, %c0_i32_46] : memref<2x8x128xf32, #tpu.memory_space<vmem>> -> memref<1x1x128xf32, #tpu.memory_space<vmem>>
    %76 = tpu.memref_squeeze %75 : memref<1x1x128xf32, #tpu.memory_space<vmem>> -> memref<1x128xf32, #tpu.memory_space<vmem>>
    %77 = tpu.memref_slice %arg9[%c3_i32_44, %c2_i32_30] : memref<4x8x!tpu.dma_semaphore, #tpu.memory_space<semaphore_mem>> -> memref<1x1x!tpu.dma_semaphore, #tpu.memory_space<semaphore_mem>>
    %78 = tpu.memref_squeeze %77 : memref<1x1x!tpu.dma_semaphore, #tpu.memory_space<semaphore_mem>> -> memref<!tpu.dma_semaphore, #tpu.memory_space<semaphore_mem>>
    tpu.enqueue_dma source(%74 : memref<1x128xf32, #tpu.memory_space<any>>) target(%76 : memref<1x128xf32, #tpu.memory_space<vmem>>) target_semaphore(%78 : memref<!tpu.dma_semaphore, #tpu.memory_space<semaphore_mem>>)
    %c3_i32_47 = arith.constant 3 : i32
    %79 = arith.addi %0, %c3_i32_47 : i32
    %80 = arith.index_cast %79 : i32 to index
    %81 = memref.load %arg1[%80] : memref<8xi32, #tpu.memory_space<smem>>
    %82 = arith.addi %0, %c3_i32_47 : i32
    %83 = arith.index_cast %82 : i32 to index
    %84 = memref.load %arg2[%83] : memref<8xi32, #tpu.memory_space<smem>>
    %c0_i32_48 = arith.constant 0 : i32
    %c0_i32_49 = arith.constant 0 : i32
    %c0_i32_50 = arith.constant 0 : i32
    %85 = tpu.memref_slice %arg3[%81, %c0_i32_50] : memref<64x128xf32, #tpu.memory_space<any>> -> memref<1x128xf32, #tpu.memory_space<any>>
    %c0_i32_51 = arith.constant 0 : i32
    %86 = tpu.memref_slice %arg7[%c0_i32_48, %c3_i32_47, %c0_i32_51] : memref<2x8x128xf32, #tpu.memory_space<vmem>> -> memref<1x1x128xf32, #tpu.memory_space<vmem>>
    %87 = tpu.memref_squeeze %86 : memref<1x1x128xf32, #tpu.memory_space<vmem>> -> memref<1x128xf32, #tpu.memory_space<vmem>>
    %88 = tpu.memref_slice %arg9[%c0_i32_49, %c3_i32_47] : memref<4x8x!tpu.dma_semaphore, #tpu.memory_space<semaphore_mem>> -> memref<1x1x!tpu.dma_semaphore, #tpu.memory_space<semaphore_mem>>
    %89 = tpu.memref_squeeze %88 : memref<1x1x!tpu.dma_semaphore, #tpu.memory_space<semaphore_mem>> -> memref<!tpu.dma_semaphore, #tpu.memory_space<semaphore_mem>>
    tpu.enqueue_dma source(%85 : memref<1x128xf32, #tpu.memory_space<any>>) target(%87 : memref<1x128xf32, #tpu.memory_space<vmem>>) target_semaphore(%89 : memref<!tpu.dma_semaphore, #tpu.memory_space<semaphore_mem>>)
    %c1_i32_52 = arith.constant 1 : i32
    %c1_i32_53 = arith.constant 1 : i32
    %c0_i32_54 = arith.constant 0 : i32
    %90 = tpu.memref_slice %arg4[%81, %c0_i32_54] : memref<64x128xf32, #tpu.memory_space<any>> -> memref<1x128xf32, #tpu.memory_space<any>>
    %c0_i32_55 = arith.constant 0 : i32
    %91 = tpu.memref_slice %arg7[%c1_i32_52, %c3_i32_47, %c0_i32_55] : memref<2x8x128xf32, #tpu.memory_space<vmem>> -> memref<1x1x128xf32, #tpu.memory_space<vmem>>
    %92 = tpu.memref_squeeze %91 : memref<1x1x128xf32, #tpu.memory_space<vmem>> -> memref<1x128xf32, #tpu.memory_space<vmem>>
    %93 = tpu.memref_slice %arg9[%c1_i32_53, %c3_i32_47] : memref<4x8x!tpu.dma_semaphore, #tpu.memory_space<semaphore_mem>> -> memref<1x1x!tpu.dma_semaphore, #tpu.memory_space<semaphore_mem>>
    %94 = tpu.memref_squeeze %93 : memref<1x1x!tpu.dma_semaphore, #tpu.memory_space<semaphore_mem>> -> memref<!tpu.dma_semaphore, #tpu.memory_space<semaphore_mem>>
    tpu.enqueue_dma source(%90 : memref<1x128xf32, #tpu.memory_space<any>>) target(%92 : memref<1x128xf32, #tpu.memory_space<vmem>>) target_semaphore(%94 : memref<!tpu.dma_semaphore, #tpu.memory_space<semaphore_mem>>)
    %c0_i32_56 = arith.constant 0 : i32
    %c2_i32_57 = arith.constant 2 : i32
    %c0_i32_58 = arith.constant 0 : i32
    %95 = tpu.memref_slice %arg3[%84, %c0_i32_58] : memref<64x128xf32, #tpu.memory_space<any>> -> memref<1x128xf32, #tpu.memory_space<any>>
    %c0_i32_59 = arith.constant 0 : i32
    %96 = tpu.memref_slice %arg8[%c0_i32_56, %c3_i32_47, %c0_i32_59] : memref<2x8x128xf32, #tpu.memory_space<vmem>> -> memref<1x1x128xf32, #tpu.memory_space<vmem>>
    %97 = tpu.memref_squeeze %96 : memref<1x1x128xf32, #tpu.memory_space<vmem>> -> memref<1x128xf32, #tpu.memory_space<vmem>>
    %98 = tpu.memref_slice %arg9[%c2_i32_57, %c3_i32_47] : memref<4x8x!tpu.dma_semaphore, #tpu.memory_space<semaphore_mem>> -> memref<1x1x!tpu.dma_semaphore, #tpu.memory_space<semaphore_mem>>
    %99 = tpu.memref_squeeze %98 : memref<1x1x!tpu.dma_semaphore, #tpu.memory_space<semaphore_mem>> -> memref<!tpu.dma_semaphore, #tpu.memory_space<semaphore_mem>>
    tpu.enqueue_dma source(%95 : memref<1x128xf32, #tpu.memory_space<any>>) target(%97 : memref<1x128xf32, #tpu.memory_space<vmem>>) target_semaphore(%99 : memref<!tpu.dma_semaphore, #tpu.memory_space<semaphore_mem>>)
    %c1_i32_60 = arith.constant 1 : i32
    %c3_i32_61 = arith.constant 3 : i32
    %c0_i32_62 = arith.constant 0 : i32
    %100 = tpu.memref_slice %arg5[%84, %c0_i32_62] : memref<64x128xf32, #tpu.memory_space<any>> -> memref<1x128xf32, #tpu.memory_space<any>>
    %c0_i32_63 = arith.constant 0 : i32
    %101 = tpu.memref_slice %arg8[%c1_i32_60, %c3_i32_47, %c0_i32_63] : memref<2x8x128xf32, #tpu.memory_space<vmem>> -> memref<1x1x128xf32, #tpu.memory_space<vmem>>
    %102 = tpu.memref_squeeze %101 : memref<1x1x128xf32, #tpu.memory_space<vmem>> -> memref<1x128xf32, #tpu.memory_space<vmem>>
    %103 = tpu.memref_slice %arg9[%c3_i32_61, %c3_i32_47] : memref<4x8x!tpu.dma_semaphore, #tpu.memory_space<semaphore_mem>> -> memref<1x1x!tpu.dma_semaphore, #tpu.memory_space<semaphore_mem>>
    %104 = tpu.memref_squeeze %103 : memref<1x1x!tpu.dma_semaphore, #tpu.memory_space<semaphore_mem>> -> memref<!tpu.dma_semaphore, #tpu.memory_space<semaphore_mem>>
    tpu.enqueue_dma source(%100 : memref<1x128xf32, #tpu.memory_space<any>>) target(%102 : memref<1x128xf32, #tpu.memory_space<vmem>>) target_semaphore(%104 : memref<!tpu.dma_semaphore, #tpu.memory_space<semaphore_mem>>)
    %c4_i32 = arith.constant 4 : i32
    %105 = arith.addi %0, %c4_i32 : i32
    %106 = arith.index_cast %105 : i32 to index
    %107 = memref.load %arg1[%106] : memref<8xi32, #tpu.memory_space<smem>>
    %108 = arith.addi %0, %c4_i32 : i32
    %109 = arith.index_cast %108 : i32 to index
    %110 = memref.load %arg2[%109] : memref<8xi32, #tpu.memory_space<smem>>
    %c0_i32_64 = arith.constant 0 : i32
    %c0_i32_65 = arith.constant 0 : i32
    %c0_i32_66 = arith.constant 0 : i32
    %111 = tpu.memref_slice %arg3[%107, %c0_i32_66] : memref<64x128xf32, #tpu.memory_space<any>> -> memref<1x128xf32, #tpu.memory_space<any>>
    %c0_i32_67 = arith.constant 0 : i32
    %112 = tpu.memref_slice %arg7[%c0_i32_64, %c4_i32, %c0_i32_67] : memref<2x8x128xf32, #tpu.memory_space<vmem>> -> memref<1x1x128xf32, #tpu.memory_space<vmem>>
    %113 = tpu.memref_squeeze %112 : memref<1x1x128xf32, #tpu.memory_space<vmem>> -> memref<1x128xf32, #tpu.memory_space<vmem>>
    %114 = tpu.memref_slice %arg9[%c0_i32_65, %c4_i32] : memref<4x8x!tpu.dma_semaphore, #tpu.memory_space<semaphore_mem>> -> memref<1x1x!tpu.dma_semaphore, #tpu.memory_space<semaphore_mem>>
    %115 = tpu.memref_squeeze %114 : memref<1x1x!tpu.dma_semaphore, #tpu.memory_space<semaphore_mem>> -> memref<!tpu.dma_semaphore, #tpu.memory_space<semaphore_mem>>
    tpu.enqueue_dma source(%111 : memref<1x128xf32, #tpu.memory_space<any>>) target(%113 : memref<1x128xf32, #tpu.memory_space<vmem>>) target_semaphore(%115 : memref<!tpu.dma_semaphore, #tpu.memory_space<semaphore_mem>>)
    %c1_i32_68 = arith.constant 1 : i32
    %c1_i32_69 = arith.constant 1 : i32
    %c0_i32_70 = arith.constant 0 : i32
    %116 = tpu.memref_slice %arg4[%107, %c0_i32_70] : memref<64x128xf32, #tpu.memory_space<any>> -> memref<1x128xf32, #tpu.memory_space<any>>
    %c0_i32_71 = arith.constant 0 : i32
    %117 = tpu.memref_slice %arg7[%c1_i32_68, %c4_i32, %c0_i32_71] : memref<2x8x128xf32, #tpu.memory_space<vmem>> -> memref<1x1x128xf32, #tpu.memory_space<vmem>>
    %118 = tpu.memref_squeeze %117 : memref<1x1x128xf32, #tpu.memory_space<vmem>> -> memref<1x128xf32, #tpu.memory_space<vmem>>
    %119 = tpu.memref_slice %arg9[%c1_i32_69, %c4_i32] : memref<4x8x!tpu.dma_semaphore, #tpu.memory_space<semaphore_mem>> -> memref<1x1x!tpu.dma_semaphore, #tpu.memory_space<semaphore_mem>>
    %120 = tpu.memref_squeeze %119 : memref<1x1x!tpu.dma_semaphore, #tpu.memory_space<semaphore_mem>> -> memref<!tpu.dma_semaphore, #tpu.memory_space<semaphore_mem>>
    tpu.enqueue_dma source(%116 : memref<1x128xf32, #tpu.memory_space<any>>) target(%118 : memref<1x128xf32, #tpu.memory_space<vmem>>) target_semaphore(%120 : memref<!tpu.dma_semaphore, #tpu.memory_space<semaphore_mem>>)
    %c0_i32_72 = arith.constant 0 : i32
    %c2_i32_73 = arith.constant 2 : i32
    %c0_i32_74 = arith.constant 0 : i32
    %121 = tpu.memref_slice %arg3[%110, %c0_i32_74] : memref<64x128xf32, #tpu.memory_space<any>> -> memref<1x128xf32, #tpu.memory_space<any>>
    %c0_i32_75 = arith.constant 0 : i32
    %122 = tpu.memref_slice %arg8[%c0_i32_72, %c4_i32, %c0_i32_75] : memref<2x8x128xf32, #tpu.memory_space<vmem>> -> memref<1x1x128xf32, #tpu.memory_space<vmem>>
    %123 = tpu.memref_squeeze %122 : memref<1x1x128xf32, #tpu.memory_space<vmem>> -> memref<1x128xf32, #tpu.memory_space<vmem>>
    %124 = tpu.memref_slice %arg9[%c2_i32_73, %c4_i32] : memref<4x8x!tpu.dma_semaphore, #tpu.memory_space<semaphore_mem>> -> memref<1x1x!tpu.dma_semaphore, #tpu.memory_space<semaphore_mem>>
    %125 = tpu.memref_squeeze %124 : memref<1x1x!tpu.dma_semaphore, #tpu.memory_space<semaphore_mem>> -> memref<!tpu.dma_semaphore, #tpu.memory_space<semaphore_mem>>
    tpu.enqueue_dma source(%121 : memref<1x128xf32, #tpu.memory_space<any>>) target(%123 : memref<1x128xf32, #tpu.memory_space<vmem>>) target_semaphore(%125 : memref<!tpu.dma_semaphore, #tpu.memory_space<semaphore_mem>>)
    %c1_i32_76 = arith.constant 1 : i32
    %c3_i32_77 = arith.constant 3 : i32
    %c0_i32_78 = arith.constant 0 : i32
    %126 = tpu.memref_slice %arg5[%110, %c0_i32_78] : memref<64x128xf32, #tpu.memory_space<any>> -> memref<1x128xf32, #tpu.memory_space<any>>
    %c0_i32_79 = arith.constant 0 : i32
    %127 = tpu.memref_slice %arg8[%c1_i32_76, %c4_i32, %c0_i32_79] : memref<2x8x128xf32, #tpu.memory_space<vmem>> -> memref<1x1x128xf32, #tpu.memory_space<vmem>>
    %128 = tpu.memref_squeeze %127 : memref<1x1x128xf32, #tpu.memory_space<vmem>> -> memref<1x128xf32, #tpu.memory_space<vmem>>
    %129 = tpu.memref_slice %arg9[%c3_i32_77, %c4_i32] : memref<4x8x!tpu.dma_semaphore, #tpu.memory_space<semaphore_mem>> -> memref<1x1x!tpu.dma_semaphore, #tpu.memory_space<semaphore_mem>>
    %130 = tpu.memref_squeeze %129 : memref<1x1x!tpu.dma_semaphore, #tpu.memory_space<semaphore_mem>> -> memref<!tpu.dma_semaphore, #tpu.memory_space<semaphore_mem>>
    tpu.enqueue_dma source(%126 : memref<1x128xf32, #tpu.memory_space<any>>) target(%128 : memref<1x128xf32, #tpu.memory_space<vmem>>) target_semaphore(%130 : memref<!tpu.dma_semaphore, #tpu.memory_space<semaphore_mem>>)
    %c5_i32 = arith.constant 5 : i32
    %131 = arith.addi %0, %c5_i32 : i32
    %132 = arith.index_cast %131 : i32 to index
    %133 = memref.load %arg1[%132] : memref<8xi32, #tpu.memory_space<smem>>
    %134 = arith.addi %0, %c5_i32 : i32
    %135 = arith.index_cast %134 : i32 to index
    %136 = memref.load %arg2[%135] : memref<8xi32, #tpu.memory_space<smem>>
    %c0_i32_80 = arith.constant 0 : i32
    %c0_i32_81 = arith.constant 0 : i32
    %c0_i32_82 = arith.constant 0 : i32
    %137 = tpu.memref_slice %arg3[%133, %c0_i32_82] : memref<64x128xf32, #tpu.memory_space<any>> -> memref<1x128xf32, #tpu.memory_space<any>>
    %c0_i32_83 = arith.constant 0 : i32
    %138 = tpu.memref_slice %arg7[%c0_i32_80, %c5_i32, %c0_i32_83] : memref<2x8x128xf32, #tpu.memory_space<vmem>> -> memref<1x1x128xf32, #tpu.memory_space<vmem>>
    %139 = tpu.memref_squeeze %138 : memref<1x1x128xf32, #tpu.memory_space<vmem>> -> memref<1x128xf32, #tpu.memory_space<vmem>>
    %140 = tpu.memref_slice %arg9[%c0_i32_81, %c5_i32] : memref<4x8x!tpu.dma_semaphore, #tpu.memory_space<semaphore_mem>> -> memref<1x1x!tpu.dma_semaphore, #tpu.memory_space<semaphore_mem>>
    %141 = tpu.memref_squeeze %140 : memref<1x1x!tpu.dma_semaphore, #tpu.memory_space<semaphore_mem>> -> memref<!tpu.dma_semaphore, #tpu.memory_space<semaphore_mem>>
    tpu.enqueue_dma source(%137 : memref<1x128xf32, #tpu.memory_space<any>>) target(%139 : memref<1x128xf32, #tpu.memory_space<vmem>>) target_semaphore(%141 : memref<!tpu.dma_semaphore, #tpu.memory_space<semaphore_mem>>)
    %c1_i32_84 = arith.constant 1 : i32
    %c1_i32_85 = arith.constant 1 : i32
    %c0_i32_86 = arith.constant 0 : i32
    %142 = tpu.memref_slice %arg4[%133, %c0_i32_86] : memref<64x128xf32, #tpu.memory_space<any>> -> memref<1x128xf32, #tpu.memory_space<any>>
    %c0_i32_87 = arith.constant 0 : i32
    %143 = tpu.memref_slice %arg7[%c1_i32_84, %c5_i32, %c0_i32_87] : memref<2x8x128xf32, #tpu.memory_space<vmem>> -> memref<1x1x128xf32, #tpu.memory_space<vmem>>
    %144 = tpu.memref_squeeze %143 : memref<1x1x128xf32, #tpu.memory_space<vmem>> -> memref<1x128xf32, #tpu.memory_space<vmem>>
    %145 = tpu.memref_slice %arg9[%c1_i32_85, %c5_i32] : memref<4x8x!tpu.dma_semaphore, #tpu.memory_space<semaphore_mem>> -> memref<1x1x!tpu.dma_semaphore, #tpu.memory_space<semaphore_mem>>
    %146 = tpu.memref_squeeze %145 : memref<1x1x!tpu.dma_semaphore, #tpu.memory_space<semaphore_mem>> -> memref<!tpu.dma_semaphore, #tpu.memory_space<semaphore_mem>>
    tpu.enqueue_dma source(%142 : memref<1x128xf32, #tpu.memory_space<any>>) target(%144 : memref<1x128xf32, #tpu.memory_space<vmem>>) target_semaphore(%146 : memref<!tpu.dma_semaphore, #tpu.memory_space<semaphore_mem>>)
    %c0_i32_88 = arith.constant 0 : i32
    %c2_i32_89 = arith.constant 2 : i32
    %c0_i32_90 = arith.constant 0 : i32
    %147 = tpu.memref_slice %arg3[%136, %c0_i32_90] : memref<64x128xf32, #tpu.memory_space<any>> -> memref<1x128xf32, #tpu.memory_space<any>>
    %c0_i32_91 = arith.constant 0 : i32
    %148 = tpu.memref_slice %arg8[%c0_i32_88, %c5_i32, %c0_i32_91] : memref<2x8x128xf32, #tpu.memory_space<vmem>> -> memref<1x1x128xf32, #tpu.memory_space<vmem>>
    %149 = tpu.memref_squeeze %148 : memref<1x1x128xf32, #tpu.memory_space<vmem>> -> memref<1x128xf32, #tpu.memory_space<vmem>>
    %150 = tpu.memref_slice %arg9[%c2_i32_89, %c5_i32] : memref<4x8x!tpu.dma_semaphore, #tpu.memory_space<semaphore_mem>> -> memref<1x1x!tpu.dma_semaphore, #tpu.memory_space<semaphore_mem>>
    %151 = tpu.memref_squeeze %150 : memref<1x1x!tpu.dma_semaphore, #tpu.memory_space<semaphore_mem>> -> memref<!tpu.dma_semaphore, #tpu.memory_space<semaphore_mem>>
    tpu.enqueue_dma source(%147 : memref<1x128xf32, #tpu.memory_space<any>>) target(%149 : memref<1x128xf32, #tpu.memory_space<vmem>>) target_semaphore(%151 : memref<!tpu.dma_semaphore, #tpu.memory_space<semaphore_mem>>)
    %c1_i32_92 = arith.constant 1 : i32
    %c3_i32_93 = arith.constant 3 : i32
    %c0_i32_94 = arith.constant 0 : i32
    %152 = tpu.memref_slice %arg5[%136, %c0_i32_94] : memref<64x128xf32, #tpu.memory_space<any>> -> memref<1x128xf32, #tpu.memory_space<any>>
    %c0_i32_95 = arith.constant 0 : i32
    %153 = tpu.memref_slice %arg8[%c1_i32_92, %c5_i32, %c0_i32_95] : memref<2x8x128xf32, #tpu.memory_space<vmem>> -> memref<1x1x128xf32, #tpu.memory_space<vmem>>
    %154 = tpu.memref_squeeze %153 : memref<1x1x128xf32, #tpu.memory_space<vmem>> -> memref<1x128xf32, #tpu.memory_space<vmem>>
    %155 = tpu.memref_slice %arg9[%c3_i32_93, %c5_i32] : memref<4x8x!tpu.dma_semaphore, #tpu.memory_space<semaphore_mem>> -> memref<1x1x!tpu.dma_semaphore, #tpu.memory_space<semaphore_mem>>
    %156 = tpu.memref_squeeze %155 : memref<1x1x!tpu.dma_semaphore, #tpu.memory_space<semaphore_mem>> -> memref<!tpu.dma_semaphore, #tpu.memory_space<semaphore_mem>>
    tpu.enqueue_dma source(%152 : memref<1x128xf32, #tpu.memory_space<any>>) target(%154 : memref<1x128xf32, #tpu.memory_space<vmem>>) target_semaphore(%156 : memref<!tpu.dma_semaphore, #tpu.memory_space<semaphore_mem>>)
    %c6_i32 = arith.constant 6 : i32
    %157 = arith.addi %0, %c6_i32 : i32
    %158 = arith.index_cast %157 : i32 to index
    %159 = memref.load %arg1[%158] : memref<8xi32, #tpu.memory_space<smem>>
    %160 = arith.addi %0, %c6_i32 : i32
    %161 = arith.index_cast %160 : i32 to index
    %162 = memref.load %arg2[%161] : memref<8xi32, #tpu.memory_space<smem>>
    %c0_i32_96 = arith.constant 0 : i32
    %c0_i32_97 = arith.constant 0 : i32
    %c0_i32_98 = arith.constant 0 : i32
    %163 = tpu.memref_slice %arg3[%159, %c0_i32_98] : memref<64x128xf32, #tpu.memory_space<any>> -> memref<1x128xf32, #tpu.memory_space<any>>
    %c0_i32_99 = arith.constant 0 : i32
    %164 = tpu.memref_slice %arg7[%c0_i32_96, %c6_i32, %c0_i32_99] : memref<2x8x128xf32, #tpu.memory_space<vmem>> -> memref<1x1x128xf32, #tpu.memory_space<vmem>>
    %165 = tpu.memref_squeeze %164 : memref<1x1x128xf32, #tpu.memory_space<vmem>> -> memref<1x128xf32, #tpu.memory_space<vmem>>
    %166 = tpu.memref_slice %arg9[%c0_i32_97, %c6_i32] : memref<4x8x!tpu.dma_semaphore, #tpu.memory_space<semaphore_mem>> -> memref<1x1x!tpu.dma_semaphore, #tpu.memory_space<semaphore_mem>>
    %167 = tpu.memref_squeeze %166 : memref<1x1x!tpu.dma_semaphore, #tpu.memory_space<semaphore_mem>> -> memref<!tpu.dma_semaphore, #tpu.memory_space<semaphore_mem>>
    tpu.enqueue_dma source(%163 : memref<1x128xf32, #tpu.memory_space<any>>) target(%165 : memref<1x128xf32, #tpu.memory_space<vmem>>) target_semaphore(%167 : memref<!tpu.dma_semaphore, #tpu.memory_space<semaphore_mem>>)
    %c1_i32_100 = arith.constant 1 : i32
    %c1_i32_101 = arith.constant 1 : i32
    %c0_i32_102 = arith.constant 0 : i32
    %168 = tpu.memref_slice %arg4[%159, %c0_i32_102] : memref<64x128xf32, #tpu.memory_space<any>> -> memref<1x128xf32, #tpu.memory_space<any>>
    %c0_i32_103 = arith.constant 0 : i32
    %169 = tpu.memref_slice %arg7[%c1_i32_100, %c6_i32, %c0_i32_103] : memref<2x8x128xf32, #tpu.memory_space<vmem>> -> memref<1x1x128xf32, #tpu.memory_space<vmem>>
    %170 = tpu.memref_squeeze %169 : memref<1x1x128xf32, #tpu.memory_space<vmem>> -> memref<1x128xf32, #tpu.memory_space<vmem>>
    %171 = tpu.memref_slice %arg9[%c1_i32_101, %c6_i32] : memref<4x8x!tpu.dma_semaphore, #tpu.memory_space<semaphore_mem>> -> memref<1x1x!tpu.dma_semaphore, #tpu.memory_space<semaphore_mem>>
    %172 = tpu.memref_squeeze %171 : memref<1x1x!tpu.dma_semaphore, #tpu.memory_space<semaphore_mem>> -> memref<!tpu.dma_semaphore, #tpu.memory_space<semaphore_mem>>
    tpu.enqueue_dma source(%168 : memref<1x128xf32, #tpu.memory_space<any>>) target(%170 : memref<1x128xf32, #tpu.memory_space<vmem>>) target_semaphore(%172 : memref<!tpu.dma_semaphore, #tpu.memory_space<semaphore_mem>>)
    %c0_i32_104 = arith.constant 0 : i32
    %c2_i32_105 = arith.constant 2 : i32
    %c0_i32_106 = arith.constant 0 : i32
    %173 = tpu.memref_slice %arg3[%162, %c0_i32_106] : memref<64x128xf32, #tpu.memory_space<any>> -> memref<1x128xf32, #tpu.memory_space<any>>
    %c0_i32_107 = arith.constant 0 : i32
    %174 = tpu.memref_slice %arg8[%c0_i32_104, %c6_i32, %c0_i32_107] : memref<2x8x128xf32, #tpu.memory_space<vmem>> -> memref<1x1x128xf32, #tpu.memory_space<vmem>>
    %175 = tpu.memref_squeeze %174 : memref<1x1x128xf32, #tpu.memory_space<vmem>> -> memref<1x128xf32, #tpu.memory_space<vmem>>
    %176 = tpu.memref_slice %arg9[%c2_i32_105, %c6_i32] : memref<4x8x!tpu.dma_semaphore, #tpu.memory_space<semaphore_mem>> -> memref<1x1x!tpu.dma_semaphore, #tpu.memory_space<semaphore_mem>>
    %177 = tpu.memref_squeeze %176 : memref<1x1x!tpu.dma_semaphore, #tpu.memory_space<semaphore_mem>> -> memref<!tpu.dma_semaphore, #tpu.memory_space<semaphore_mem>>
    tpu.enqueue_dma source(%173 : memref<1x128xf32, #tpu.memory_space<any>>) target(%175 : memref<1x128xf32, #tpu.memory_space<vmem>>) target_semaphore(%177 : memref<!tpu.dma_semaphore, #tpu.memory_space<semaphore_mem>>)
    %c1_i32_108 = arith.constant 1 : i32
    %c3_i32_109 = arith.constant 3 : i32
    %c0_i32_110 = arith.constant 0 : i32
    %178 = tpu.memref_slice %arg5[%162, %c0_i32_110] : memref<64x128xf32, #tpu.memory_space<any>> -> memref<1x128xf32, #tpu.memory_space<any>>
    %c0_i32_111 = arith.constant 0 : i32
    %179 = tpu.memref_slice %arg8[%c1_i32_108, %c6_i32, %c0_i32_111] : memref<2x8x128xf32, #tpu.memory_space<vmem>> -> memref<1x1x128xf32, #tpu.memory_space<vmem>>
    %180 = tpu.memref_squeeze %179 : memref<1x1x128xf32, #tpu.memory_space<vmem>> -> memref<1x128xf32, #tpu.memory_space<vmem>>
    %181 = tpu.memref_slice %arg9[%c3_i32_109, %c6_i32] : memref<4x8x!tpu.dma_semaphore, #tpu.memory_space<semaphore_mem>> -> memref<1x1x!tpu.dma_semaphore, #tpu.memory_space<semaphore_mem>>
    %182 = tpu.memref_squeeze %181 : memref<1x1x!tpu.dma_semaphore, #tpu.memory_space<semaphore_mem>> -> memref<!tpu.dma_semaphore, #tpu.memory_space<semaphore_mem>>
    tpu.enqueue_dma source(%178 : memref<1x128xf32, #tpu.memory_space<any>>) target(%180 : memref<1x128xf32, #tpu.memory_space<vmem>>) target_semaphore(%182 : memref<!tpu.dma_semaphore, #tpu.memory_space<semaphore_mem>>)
    %c7_i32 = arith.constant 7 : i32
    %183 = arith.addi %0, %c7_i32 : i32
    %184 = arith.index_cast %183 : i32 to index
    %185 = memref.load %arg1[%184] : memref<8xi32, #tpu.memory_space<smem>>
    %186 = arith.addi %0, %c7_i32 : i32
    %187 = arith.index_cast %186 : i32 to index
    %188 = memref.load %arg2[%187] : memref<8xi32, #tpu.memory_space<smem>>
    %c0_i32_112 = arith.constant 0 : i32
    %c0_i32_113 = arith.constant 0 : i32
    %c0_i32_114 = arith.constant 0 : i32
    %189 = tpu.memref_slice %arg3[%185, %c0_i32_114] : memref<64x128xf32, #tpu.memory_space<any>> -> memref<1x128xf32, #tpu.memory_space<any>>
    %c0_i32_115 = arith.constant 0 : i32
    %190 = tpu.memref_slice %arg7[%c0_i32_112, %c7_i32, %c0_i32_115] : memref<2x8x128xf32, #tpu.memory_space<vmem>> -> memref<1x1x128xf32, #tpu.memory_space<vmem>>
    %191 = tpu.memref_squeeze %190 : memref<1x1x128xf32, #tpu.memory_space<vmem>> -> memref<1x128xf32, #tpu.memory_space<vmem>>
    %192 = tpu.memref_slice %arg9[%c0_i32_113, %c7_i32] : memref<4x8x!tpu.dma_semaphore, #tpu.memory_space<semaphore_mem>> -> memref<1x1x!tpu.dma_semaphore, #tpu.memory_space<semaphore_mem>>
    %193 = tpu.memref_squeeze %192 : memref<1x1x!tpu.dma_semaphore, #tpu.memory_space<semaphore_mem>> -> memref<!tpu.dma_semaphore, #tpu.memory_space<semaphore_mem>>
    tpu.enqueue_dma source(%189 : memref<1x128xf32, #tpu.memory_space<any>>) target(%191 : memref<1x128xf32, #tpu.memory_space<vmem>>) target_semaphore(%193 : memref<!tpu.dma_semaphore, #tpu.memory_space<semaphore_mem>>)
    %c1_i32_116 = arith.constant 1 : i32
    %c1_i32_117 = arith.constant 1 : i32
    %c0_i32_118 = arith.constant 0 : i32
    %194 = tpu.memref_slice %arg4[%185, %c0_i32_118] : memref<64x128xf32, #tpu.memory_space<any>> -> memref<1x128xf32, #tpu.memory_space<any>>
    %c0_i32_119 = arith.constant 0 : i32
    %195 = tpu.memref_slice %arg7[%c1_i32_116, %c7_i32, %c0_i32_119] : memref<2x8x128xf32, #tpu.memory_space<vmem>> -> memref<1x1x128xf32, #tpu.memory_space<vmem>>
    %196 = tpu.memref_squeeze %195 : memref<1x1x128xf32, #tpu.memory_space<vmem>> -> memref<1x128xf32, #tpu.memory_space<vmem>>
    %197 = tpu.memref_slice %arg9[%c1_i32_117, %c7_i32] : memref<4x8x!tpu.dma_semaphore, #tpu.memory_space<semaphore_mem>> -> memref<1x1x!tpu.dma_semaphore, #tpu.memory_space<semaphore_mem>>
    %198 = tpu.memref_squeeze %197 : memref<1x1x!tpu.dma_semaphore, #tpu.memory_space<semaphore_mem>> -> memref<!tpu.dma_semaphore, #tpu.memory_space<semaphore_mem>>
    tpu.enqueue_dma source(%194 : memref<1x128xf32, #tpu.memory_space<any>>) target(%196 : memref<1x128xf32, #tpu.memory_space<vmem>>) target_semaphore(%198 : memref<!tpu.dma_semaphore, #tpu.memory_space<semaphore_mem>>)
    %c0_i32_120 = arith.constant 0 : i32
    %c2_i32_121 = arith.constant 2 : i32
    %c0_i32_122 = arith.constant 0 : i32
    %199 = tpu.memref_slice %arg3[%188, %c0_i32_122] : memref<64x128xf32, #tpu.memory_space<any>> -> memref<1x128xf32, #tpu.memory_space<any>>
    %c0_i32_123 = arith.constant 0 : i32
    %200 = tpu.memref_slice %arg8[%c0_i32_120, %c7_i32, %c0_i32_123] : memref<2x8x128xf32, #tpu.memory_space<vmem>> -> memref<1x1x128xf32, #tpu.memory_space<vmem>>
    %201 = tpu.memref_squeeze %200 : memref<1x1x128xf32, #tpu.memory_space<vmem>> -> memref<1x128xf32, #tpu.memory_space<vmem>>
    %202 = tpu.memref_slice %arg9[%c2_i32_121, %c7_i32] : memref<4x8x!tpu.dma_semaphore, #tpu.memory_space<semaphore_mem>> -> memref<1x1x!tpu.dma_semaphore, #tpu.memory_space<semaphore_mem>>
    %203 = tpu.memref_squeeze %202 : memref<1x1x!tpu.dma_semaphore, #tpu.memory_space<semaphore_mem>> -> memref<!tpu.dma_semaphore, #tpu.memory_space<semaphore_mem>>
    tpu.enqueue_dma source(%199 : memref<1x128xf32, #tpu.memory_space<any>>) target(%201 : memref<1x128xf32, #tpu.memory_space<vmem>>) target_semaphore(%203 : memref<!tpu.dma_semaphore, #tpu.memory_space<semaphore_mem>>)
    %c1_i32_124 = arith.constant 1 : i32
    %c3_i32_125 = arith.constant 3 : i32
    %c0_i32_126 = arith.constant 0 : i32
    %204 = tpu.memref_slice %arg5[%188, %c0_i32_126] : memref<64x128xf32, #tpu.memory_space<any>> -> memref<1x128xf32, #tpu.memory_space<any>>
    %c0_i32_127 = arith.constant 0 : i32
    %205 = tpu.memref_slice %arg8[%c1_i32_124, %c7_i32, %c0_i32_127] : memref<2x8x128xf32, #tpu.memory_space<vmem>> -> memref<1x1x128xf32, #tpu.memory_space<vmem>>
    %206 = tpu.memref_squeeze %205 : memref<1x1x128xf32, #tpu.memory_space<vmem>> -> memref<1x128xf32, #tpu.memory_space<vmem>>
    %207 = tpu.memref_slice %arg9[%c3_i32_125, %c7_i32] : memref<4x8x!tpu.dma_semaphore, #tpu.memory_space<semaphore_mem>> -> memref<1x1x!tpu.dma_semaphore, #tpu.memory_space<semaphore_mem>>
    %208 = tpu.memref_squeeze %207 : memref<1x1x!tpu.dma_semaphore, #tpu.memory_space<semaphore_mem>> -> memref<!tpu.dma_semaphore, #tpu.memory_space<semaphore_mem>>
    tpu.enqueue_dma source(%204 : memref<1x128xf32, #tpu.memory_space<any>>) target(%206 : memref<1x128xf32, #tpu.memory_space<vmem>>) target_semaphore(%208 : memref<!tpu.dma_semaphore, #tpu.memory_space<semaphore_mem>>)
    %c8_i32_128 = arith.constant 8 : i32
    %c0_i32_129 = arith.constant 0 : i32
    %c0_i32_130 = arith.constant 0 : i32
    %c0_i32_131 = arith.constant 0 : i32
    %c0_i32_132 = arith.constant 0 : i32
    %c0_i32_133 = arith.constant 0 : i32
    %209 = tpu.memref_slice %arg3[%c0_i32_132, %c0_i32_133] : memref<64x128xf32, #tpu.memory_space<any>> -> memref<1x128xf32, #tpu.memory_space<any>>
    %c0_i32_134 = arith.constant 0 : i32
    %210 = tpu.memref_slice %arg7[%c0_i32_130, %c0_i32_129, %c0_i32_134] : memref<2x8x128xf32, #tpu.memory_space<vmem>> -> memref<1x1x128xf32, #tpu.memory_space<vmem>>
    %211 = tpu.memref_squeeze %210 : memref<1x1x128xf32, #tpu.memory_space<vmem>> -> memref<1x128xf32, #tpu.memory_space<vmem>>
    %212 = tpu.memref_slice %arg9[%c0_i32_131, %c0_i32_129] : memref<4x8x!tpu.dma_semaphore, #tpu.memory_space<semaphore_mem>> -> memref<1x1x!tpu.dma_semaphore, #tpu.memory_space<semaphore_mem>>
    %213 = tpu.memref_squeeze %212 : memref<1x1x!tpu.dma_semaphore, #tpu.memory_space<semaphore_mem>> -> memref<!tpu.dma_semaphore, #tpu.memory_space<semaphore_mem>>
    tpu.wait_dma2 semaphore(%213 : memref<!tpu.dma_semaphore, #tpu.memory_space<semaphore_mem>>) src(%209 : memref<1x128xf32, #tpu.memory_space<any>>) dst(%211 : memref<1x128xf32, #tpu.memory_space<vmem>>)
    %c1_i32_135 = arith.constant 1 : i32
    %c1_i32_136 = arith.constant 1 : i32
    %c0_i32_137 = arith.constant 0 : i32
    %c0_i32_138 = arith.constant 0 : i32
    %214 = tpu.memref_slice %arg4[%c0_i32_137, %c0_i32_138] : memref<64x128xf32, #tpu.memory_space<any>> -> memref<1x128xf32, #tpu.memory_space<any>>
    %c0_i32_139 = arith.constant 0 : i32
    %215 = tpu.memref_slice %arg7[%c1_i32_135, %c0_i32_129, %c0_i32_139] : memref<2x8x128xf32, #tpu.memory_space<vmem>> -> memref<1x1x128xf32, #tpu.memory_space<vmem>>
    %216 = tpu.memref_squeeze %215 : memref<1x1x128xf32, #tpu.memory_space<vmem>> -> memref<1x128xf32, #tpu.memory_space<vmem>>
    %217 = tpu.memref_slice %arg9[%c1_i32_136, %c0_i32_129] : memref<4x8x!tpu.dma_semaphore, #tpu.memory_space<semaphore_mem>> -> memref<1x1x!tpu.dma_semaphore, #tpu.memory_space<semaphore_mem>>
    %218 = tpu.memref_squeeze %217 : memref<1x1x!tpu.dma_semaphore, #tpu.memory_space<semaphore_mem>> -> memref<!tpu.dma_semaphore, #tpu.memory_space<semaphore_mem>>
    tpu.wait_dma2 semaphore(%218 : memref<!tpu.dma_semaphore, #tpu.memory_space<semaphore_mem>>) src(%214 : memref<1x128xf32, #tpu.memory_space<any>>) dst(%216 : memref<1x128xf32, #tpu.memory_space<vmem>>)
    %c0_i32_140 = arith.constant 0 : i32
    %c2_i32_141 = arith.constant 2 : i32
    %c0_i32_142 = arith.constant 0 : i32
    %c0_i32_143 = arith.constant 0 : i32
    %219 = tpu.memref_slice %arg3[%c0_i32_142, %c0_i32_143] : memref<64x128xf32, #tpu.memory_space<any>> -> memref<1x128xf32, #tpu.memory_space<any>>
    %c0_i32_144 = arith.constant 0 : i32
    %220 = tpu.memref_slice %arg8[%c0_i32_140, %c0_i32_129, %c0_i32_144] : memref<2x8x128xf32, #tpu.memory_space<vmem>> -> memref<1x1x128xf32, #tpu.memory_space<vmem>>
    %221 = tpu.memref_squeeze %220 : memref<1x1x128xf32, #tpu.memory_space<vmem>> -> memref<1x128xf32, #tpu.memory_space<vmem>>
    %222 = tpu.memref_slice %arg9[%c2_i32_141, %c0_i32_129] : memref<4x8x!tpu.dma_semaphore, #tpu.memory_space<semaphore_mem>> -> memref<1x1x!tpu.dma_semaphore, #tpu.memory_space<semaphore_mem>>
    %223 = tpu.memref_squeeze %222 : memref<1x1x!tpu.dma_semaphore, #tpu.memory_space<semaphore_mem>> -> memref<!tpu.dma_semaphore, #tpu.memory_space<semaphore_mem>>
    tpu.wait_dma2 semaphore(%223 : memref<!tpu.dma_semaphore, #tpu.memory_space<semaphore_mem>>) src(%219 : memref<1x128xf32, #tpu.memory_space<any>>) dst(%221 : memref<1x128xf32, #tpu.memory_space<vmem>>)
    %c1_i32_145 = arith.constant 1 : i32
    %c3_i32_146 = arith.constant 3 : i32
    %c0_i32_147 = arith.constant 0 : i32
    %c0_i32_148 = arith.constant 0 : i32
    %224 = tpu.memref_slice %arg5[%c0_i32_147, %c0_i32_148] : memref<64x128xf32, #tpu.memory_space<any>> -> memref<1x128xf32, #tpu.memory_space<any>>
    %c0_i32_149 = arith.constant 0 : i32
    %225 = tpu.memref_slice %arg8[%c1_i32_145, %c0_i32_129, %c0_i32_149] : memref<2x8x128xf32, #tpu.memory_space<vmem>> -> memref<1x1x128xf32, #tpu.memory_space<vmem>>
    %226 = tpu.memref_squeeze %225 : memref<1x1x128xf32, #tpu.memory_space<vmem>> -> memref<1x128xf32, #tpu.memory_space<vmem>>
    %227 = tpu.memref_slice %arg9[%c3_i32_146, %c0_i32_129] : memref<4x8x!tpu.dma_semaphore, #tpu.memory_space<semaphore_mem>> -> memref<1x1x!tpu.dma_semaphore, #tpu.memory_space<semaphore_mem>>
    %228 = tpu.memref_squeeze %227 : memref<1x1x!tpu.dma_semaphore, #tpu.memory_space<semaphore_mem>> -> memref<!tpu.dma_semaphore, #tpu.memory_space<semaphore_mem>>
    tpu.wait_dma2 semaphore(%228 : memref<!tpu.dma_semaphore, #tpu.memory_space<semaphore_mem>>) src(%224 : memref<1x128xf32, #tpu.memory_space<any>>) dst(%226 : memref<1x128xf32, #tpu.memory_space<vmem>>)
    %c1_i32_150 = arith.constant 1 : i32
    %c0_i32_151 = arith.constant 0 : i32
    %c0_i32_152 = arith.constant 0 : i32
    %c0_i32_153 = arith.constant 0 : i32
    %c0_i32_154 = arith.constant 0 : i32
    %229 = tpu.memref_slice %arg3[%c0_i32_153, %c0_i32_154] : memref<64x128xf32, #tpu.memory_space<any>> -> memref<1x128xf32, #tpu.memory_space<any>>
    %c0_i32_155 = arith.constant 0 : i32
    %230 = tpu.memref_slice %arg7[%c0_i32_151, %c1_i32_150, %c0_i32_155] : memref<2x8x128xf32, #tpu.memory_space<vmem>> -> memref<1x1x128xf32, #tpu.memory_space<vmem>>
    %231 = tpu.memref_squeeze %230 : memref<1x1x128xf32, #tpu.memory_space<vmem>> -> memref<1x128xf32, #tpu.memory_space<vmem>>
    %232 = tpu.memref_slice %arg9[%c0_i32_152, %c1_i32_150] : memref<4x8x!tpu.dma_semaphore, #tpu.memory_space<semaphore_mem>> -> memref<1x1x!tpu.dma_semaphore, #tpu.memory_space<semaphore_mem>>
    %233 = tpu.memref_squeeze %232 : memref<1x1x!tpu.dma_semaphore, #tpu.memory_space<semaphore_mem>> -> memref<!tpu.dma_semaphore, #tpu.memory_space<semaphore_mem>>
    tpu.wait_dma2 semaphore(%233 : memref<!tpu.dma_semaphore, #tpu.memory_space<semaphore_mem>>) src(%229 : memref<1x128xf32, #tpu.memory_space<any>>) dst(%231 : memref<1x128xf32, #tpu.memory_space<vmem>>)
    %c1_i32_156 = arith.constant 1 : i32
    %c1_i32_157 = arith.constant 1 : i32
    %c0_i32_158 = arith.constant 0 : i32
    %c0_i32_159 = arith.constant 0 : i32
    %234 = tpu.memref_slice %arg4[%c0_i32_158, %c0_i32_159] : memref<64x128xf32, #tpu.memory_space<any>> -> memref<1x128xf32, #tpu.memory_space<any>>
    %c0_i32_160 = arith.constant 0 : i32
    %235 = tpu.memref_slice %arg7[%c1_i32_156, %c1_i32_150, %c0_i32_160] : memref<2x8x128xf32, #tpu.memory_space<vmem>> -> memref<1x1x128xf32, #tpu.memory_space<vmem>>
    %236 = tpu.memref_squeeze %235 : memref<1x1x128xf32, #tpu.memory_space<vmem>> -> memref<1x128xf32, #tpu.memory_space<vmem>>
    %237 = tpu.memref_slice %arg9[%c1_i32_157, %c1_i32_150] : memref<4x8x!tpu.dma_semaphore, #tpu.memory_space<semaphore_mem>> -> memref<1x1x!tpu.dma_semaphore, #tpu.memory_space<semaphore_mem>>
    %238 = tpu.memref_squeeze %237 : memref<1x1x!tpu.dma_semaphore, #tpu.memory_space<semaphore_mem>> -> memref<!tpu.dma_semaphore, #tpu.memory_space<semaphore_mem>>
    tpu.wait_dma2 semaphore(%238 : memref<!tpu.dma_semaphore, #tpu.memory_space<semaphore_mem>>) src(%234 : memref<1x128xf32, #tpu.memory_space<any>>) dst(%236 : memref<1x128xf32, #tpu.memory_space<vmem>>)
    %c0_i32_161 = arith.constant 0 : i32
    %c2_i32_162 = arith.constant 2 : i32
    %c0_i32_163 = arith.constant 0 : i32
    %c0_i32_164 = arith.constant 0 : i32
    %239 = tpu.memref_slice %arg3[%c0_i32_163, %c0_i32_164] : memref<64x128xf32, #tpu.memory_space<any>> -> memref<1x128xf32, #tpu.memory_space<any>>
    %c0_i32_165 = arith.constant 0 : i32
    %240 = tpu.memref_slice %arg8[%c0_i32_161, %c1_i32_150, %c0_i32_165] : memref<2x8x128xf32, #tpu.memory_space<vmem>> -> memref<1x1x128xf32, #tpu.memory_space<vmem>>
    %241 = tpu.memref_squeeze %240 : memref<1x1x128xf32, #tpu.memory_space<vmem>> -> memref<1x128xf32, #tpu.memory_space<vmem>>
    %242 = tpu.memref_slice %arg9[%c2_i32_162, %c1_i32_150] : memref<4x8x!tpu.dma_semaphore, #tpu.memory_space<semaphore_mem>> -> memref<1x1x!tpu.dma_semaphore, #tpu.memory_space<semaphore_mem>>
    %243 = tpu.memref_squeeze %242 : memref<1x1x!tpu.dma_semaphore, #tpu.memory_space<semaphore_mem>> -> memref<!tpu.dma_semaphore, #tpu.memory_space<semaphore_mem>>
    tpu.wait_dma2 semaphore(%243 : memref<!tpu.dma_semaphore, #tpu.memory_space<semaphore_mem>>) src(%239 : memref<1x128xf32, #tpu.memory_space<any>>) dst(%241 : memref<1x128xf32, #tpu.memory_space<vmem>>)
    %c1_i32_166 = arith.constant 1 : i32
    %c3_i32_167 = arith.constant 3 : i32
    %c0_i32_168 = arith.constant 0 : i32
    %c0_i32_169 = arith.constant 0 : i32
    %244 = tpu.memref_slice %arg5[%c0_i32_168, %c0_i32_169] : memref<64x128xf32, #tpu.memory_space<any>> -> memref<1x128xf32, #tpu.memory_space<any>>
    %c0_i32_170 = arith.constant 0 : i32
    %245 = tpu.memref_slice %arg8[%c1_i32_166, %c1_i32_150, %c0_i32_170] : memref<2x8x128xf32, #tpu.memory_space<vmem>> -> memref<1x1x128xf32, #tpu.memory_space<vmem>>
    %246 = tpu.memref_squeeze %245 : memref<1x1x128xf32, #tpu.memory_space<vmem>> -> memref<1x128xf32, #tpu.memory_space<vmem>>
    %247 = tpu.memref_slice %arg9[%c3_i32_167, %c1_i32_150] : memref<4x8x!tpu.dma_semaphore, #tpu.memory_space<semaphore_mem>> -> memref<1x1x!tpu.dma_semaphore, #tpu.memory_space<semaphore_mem>>
    %248 = tpu.memref_squeeze %247 : memref<1x1x!tpu.dma_semaphore, #tpu.memory_space<semaphore_mem>> -> memref<!tpu.dma_semaphore, #tpu.memory_space<semaphore_mem>>
    tpu.wait_dma2 semaphore(%248 : memref<!tpu.dma_semaphore, #tpu.memory_space<semaphore_mem>>) src(%244 : memref<1x128xf32, #tpu.memory_space<any>>) dst(%246 : memref<1x128xf32, #tpu.memory_space<vmem>>)
    %c2_i32_171 = arith.constant 2 : i32
    %c0_i32_172 = arith.constant 0 : i32
    %c0_i32_173 = arith.constant 0 : i32
    %c0_i32_174 = arith.constant 0 : i32
    %c0_i32_175 = arith.constant 0 : i32
    %249 = tpu.memref_slice %arg3[%c0_i32_174, %c0_i32_175] : memref<64x128xf32, #tpu.memory_space<any>> -> memref<1x128xf32, #tpu.memory_space<any>>
    %c0_i32_176 = arith.constant 0 : i32
    %250 = tpu.memref_slice %arg7[%c0_i32_172, %c2_i32_171, %c0_i32_176] : memref<2x8x128xf32, #tpu.memory_space<vmem>> -> memref<1x1x128xf32, #tpu.memory_space<vmem>>
    %251 = tpu.memref_squeeze %250 : memref<1x1x128xf32, #tpu.memory_space<vmem>> -> memref<1x128xf32, #tpu.memory_space<vmem>>
    %252 = tpu.memref_slice %arg9[%c0_i32_173, %c2_i32_171] : memref<4x8x!tpu.dma_semaphore, #tpu.memory_space<semaphore_mem>> -> memref<1x1x!tpu.dma_semaphore, #tpu.memory_space<semaphore_mem>>
    %253 = tpu.memref_squeeze %252 : memref<1x1x!tpu.dma_semaphore, #tpu.memory_space<semaphore_mem>> -> memref<!tpu.dma_semaphore, #tpu.memory_space<semaphore_mem>>
    tpu.wait_dma2 semaphore(%253 : memref<!tpu.dma_semaphore, #tpu.memory_space<semaphore_mem>>) src(%249 : memref<1x128xf32, #tpu.memory_space<any>>) dst(%251 : memref<1x128xf32, #tpu.memory_space<vmem>>)
    %c1_i32_177 = arith.constant 1 : i32
    %c1_i32_178 = arith.constant 1 : i32
    %c0_i32_179 = arith.constant 0 : i32
    %c0_i32_180 = arith.constant 0 : i32
    %254 = tpu.memref_slice %arg4[%c0_i32_179, %c0_i32_180] : memref<64x128xf32, #tpu.memory_space<any>> -> memref<1x128xf32, #tpu.memory_space<any>>
    %c0_i32_181 = arith.constant 0 : i32
    %255 = tpu.memref_slice %arg7[%c1_i32_177, %c2_i32_171, %c0_i32_181] : memref<2x8x128xf32, #tpu.memory_space<vmem>> -> memref<1x1x128xf32, #tpu.memory_space<vmem>>
    %256 = tpu.memref_squeeze %255 : memref<1x1x128xf32, #tpu.memory_space<vmem>> -> memref<1x128xf32, #tpu.memory_space<vmem>>
    %257 = tpu.memref_slice %arg9[%c1_i32_178, %c2_i32_171] : memref<4x8x!tpu.dma_semaphore, #tpu.memory_space<semaphore_mem>> -> memref<1x1x!tpu.dma_semaphore, #tpu.memory_space<semaphore_mem>>
    %258 = tpu.memref_squeeze %257 : memref<1x1x!tpu.dma_semaphore, #tpu.memory_space<semaphore_mem>> -> memref<!tpu.dma_semaphore, #tpu.memory_space<semaphore_mem>>
    tpu.wait_dma2 semaphore(%258 : memref<!tpu.dma_semaphore, #tpu.memory_space<semaphore_mem>>) src(%254 : memref<1x128xf32, #tpu.memory_space<any>>) dst(%256 : memref<1x128xf32, #tpu.memory_space<vmem>>)
    %c0_i32_182 = arith.constant 0 : i32
    %c2_i32_183 = arith.constant 2 : i32
    %c0_i32_184 = arith.constant 0 : i32
    %c0_i32_185 = arith.constant 0 : i32
    %259 = tpu.memref_slice %arg3[%c0_i32_184, %c0_i32_185] : memref<64x128xf32, #tpu.memory_space<any>> -> memref<1x128xf32, #tpu.memory_space<any>>
    %c0_i32_186 = arith.constant 0 : i32
    %260 = tpu.memref_slice %arg8[%c0_i32_182, %c2_i32_171, %c0_i32_186] : memref<2x8x128xf32, #tpu.memory_space<vmem>> -> memref<1x1x128xf32, #tpu.memory_space<vmem>>
    %261 = tpu.memref_squeeze %260 : memref<1x1x128xf32, #tpu.memory_space<vmem>> -> memref<1x128xf32, #tpu.memory_space<vmem>>
    %262 = tpu.memref_slice %arg9[%c2_i32_183, %c2_i32_171] : memref<4x8x!tpu.dma_semaphore, #tpu.memory_space<semaphore_mem>> -> memref<1x1x!tpu.dma_semaphore, #tpu.memory_space<semaphore_mem>>
    %263 = tpu.memref_squeeze %262 : memref<1x1x!tpu.dma_semaphore, #tpu.memory_space<semaphore_mem>> -> memref<!tpu.dma_semaphore, #tpu.memory_space<semaphore_mem>>
    tpu.wait_dma2 semaphore(%263 : memref<!tpu.dma_semaphore, #tpu.memory_space<semaphore_mem>>) src(%259 : memref<1x128xf32, #tpu.memory_space<any>>) dst(%261 : memref<1x128xf32, #tpu.memory_space<vmem>>)
    %c1_i32_187 = arith.constant 1 : i32
    %c3_i32_188 = arith.constant 3 : i32
    %c0_i32_189 = arith.constant 0 : i32
    %c0_i32_190 = arith.constant 0 : i32
    %264 = tpu.memref_slice %arg5[%c0_i32_189, %c0_i32_190] : memref<64x128xf32, #tpu.memory_space<any>> -> memref<1x128xf32, #tpu.memory_space<any>>
    %c0_i32_191 = arith.constant 0 : i32
    %265 = tpu.memref_slice %arg8[%c1_i32_187, %c2_i32_171, %c0_i32_191] : memref<2x8x128xf32, #tpu.memory_space<vmem>> -> memref<1x1x128xf32, #tpu.memory_space<vmem>>
    %266 = tpu.memref_squeeze %265 : memref<1x1x128xf32, #tpu.memory_space<vmem>> -> memref<1x128xf32, #tpu.memory_space<vmem>>
    %267 = tpu.memref_slice %arg9[%c3_i32_188, %c2_i32_171] : memref<4x8x!tpu.dma_semaphore, #tpu.memory_space<semaphore_mem>> -> memref<1x1x!tpu.dma_semaphore, #tpu.memory_space<semaphore_mem>>
    %268 = tpu.memref_squeeze %267 : memref<1x1x!tpu.dma_semaphore, #tpu.memory_space<semaphore_mem>> -> memref<!tpu.dma_semaphore, #tpu.memory_space<semaphore_mem>>
    tpu.wait_dma2 semaphore(%268 : memref<!tpu.dma_semaphore, #tpu.memory_space<semaphore_mem>>) src(%264 : memref<1x128xf32, #tpu.memory_space<any>>) dst(%266 : memref<1x128xf32, #tpu.memory_space<vmem>>)
    %c3_i32_192 = arith.constant 3 : i32
    %c0_i32_193 = arith.constant 0 : i32
    %c0_i32_194 = arith.constant 0 : i32
    %c0_i32_195 = arith.constant 0 : i32
    %c0_i32_196 = arith.constant 0 : i32
    %269 = tpu.memref_slice %arg3[%c0_i32_195, %c0_i32_196] : memref<64x128xf32, #tpu.memory_space<any>> -> memref<1x128xf32, #tpu.memory_space<any>>
    %c0_i32_197 = arith.constant 0 : i32
    %270 = tpu.memref_slice %arg7[%c0_i32_193, %c3_i32_192, %c0_i32_197] : memref<2x8x128xf32, #tpu.memory_space<vmem>> -> memref<1x1x128xf32, #tpu.memory_space<vmem>>
    %271 = tpu.memref_squeeze %270 : memref<1x1x128xf32, #tpu.memory_space<vmem>> -> memref<1x128xf32, #tpu.memory_space<vmem>>
    %272 = tpu.memref_slice %arg9[%c0_i32_194, %c3_i32_192] : memref<4x8x!tpu.dma_semaphore, #tpu.memory_space<semaphore_mem>> -> memref<1x1x!tpu.dma_semaphore, #tpu.memory_space<semaphore_mem>>
    %273 = tpu.memref_squeeze %272 : memref<1x1x!tpu.dma_semaphore, #tpu.memory_space<semaphore_mem>> -> memref<!tpu.dma_semaphore, #tpu.memory_space<semaphore_mem>>
    tpu.wait_dma2 semaphore(%273 : memref<!tpu.dma_semaphore, #tpu.memory_space<semaphore_mem>>) src(%269 : memref<1x128xf32, #tpu.memory_space<any>>) dst(%271 : memref<1x128xf32, #tpu.memory_space<vmem>>)
    %c1_i32_198 = arith.constant 1 : i32
    %c1_i32_199 = arith.constant 1 : i32
    %c0_i32_200 = arith.constant 0 : i32
    %c0_i32_201 = arith.constant 0 : i32
    %274 = tpu.memref_slice %arg4[%c0_i32_200, %c0_i32_201] : memref<64x128xf32, #tpu.memory_space<any>> -> memref<1x128xf32, #tpu.memory_space<any>>
    %c0_i32_202 = arith.constant 0 : i32
    %275 = tpu.memref_slice %arg7[%c1_i32_198, %c3_i32_192, %c0_i32_202] : memref<2x8x128xf32, #tpu.memory_space<vmem>> -> memref<1x1x128xf32, #tpu.memory_space<vmem>>
    %276 = tpu.memref_squeeze %275 : memref<1x1x128xf32, #tpu.memory_space<vmem>> -> memref<1x128xf32, #tpu.memory_space<vmem>>
    %277 = tpu.memref_slice %arg9[%c1_i32_199, %c3_i32_192] : memref<4x8x!tpu.dma_semaphore, #tpu.memory_space<semaphore_mem>> -> memref<1x1x!tpu.dma_semaphore, #tpu.memory_space<semaphore_mem>>
    %278 = tpu.memref_squeeze %277 : memref<1x1x!tpu.dma_semaphore, #tpu.memory_space<semaphore_mem>> -> memref<!tpu.dma_semaphore, #tpu.memory_space<semaphore_mem>>
    tpu.wait_dma2 semaphore(%278 : memref<!tpu.dma_semaphore, #tpu.memory_space<semaphore_mem>>) src(%274 : memref<1x128xf32, #tpu.memory_space<any>>) dst(%276 : memref<1x128xf32, #tpu.memory_space<vmem>>)
    %c0_i32_203 = arith.constant 0 : i32
    %c2_i32_204 = arith.constant 2 : i32
    %c0_i32_205 = arith.constant 0 : i32
    %c0_i32_206 = arith.constant 0 : i32
    %279 = tpu.memref_slice %arg3[%c0_i32_205, %c0_i32_206] : memref<64x128xf32, #tpu.memory_space<any>> -> memref<1x128xf32, #tpu.memory_space<any>>
    %c0_i32_207 = arith.constant 0 : i32
    %280 = tpu.memref_slice %arg8[%c0_i32_203, %c3_i32_192, %c0_i32_207] : memref<2x8x128xf32, #tpu.memory_space<vmem>> -> memref<1x1x128xf32, #tpu.memory_space<vmem>>
    %281 = tpu.memref_squeeze %280 : memref<1x1x128xf32, #tpu.memory_space<vmem>> -> memref<1x128xf32, #tpu.memory_space<vmem>>
    %282 = tpu.memref_slice %arg9[%c2_i32_204, %c3_i32_192] : memref<4x8x!tpu.dma_semaphore, #tpu.memory_space<semaphore_mem>> -> memref<1x1x!tpu.dma_semaphore, #tpu.memory_space<semaphore_mem>>
    %283 = tpu.memref_squeeze %282 : memref<1x1x!tpu.dma_semaphore, #tpu.memory_space<semaphore_mem>> -> memref<!tpu.dma_semaphore, #tpu.memory_space<semaphore_mem>>
    tpu.wait_dma2 semaphore(%283 : memref<!tpu.dma_semaphore, #tpu.memory_space<semaphore_mem>>) src(%279 : memref<1x128xf32, #tpu.memory_space<any>>) dst(%281 : memref<1x128xf32, #tpu.memory_space<vmem>>)
    %c1_i32_208 = arith.constant 1 : i32
    %c3_i32_209 = arith.constant 3 : i32
    %c0_i32_210 = arith.constant 0 : i32
    %c0_i32_211 = arith.constant 0 : i32
    %284 = tpu.memref_slice %arg5[%c0_i32_210, %c0_i32_211] : memref<64x128xf32, #tpu.memory_space<any>> -> memref<1x128xf32, #tpu.memory_space<any>>
    %c0_i32_212 = arith.constant 0 : i32
    %285 = tpu.memref_slice %arg8[%c1_i32_208, %c3_i32_192, %c0_i32_212] : memref<2x8x128xf32, #tpu.memory_space<vmem>> -> memref<1x1x128xf32, #tpu.memory_space<vmem>>
    %286 = tpu.memref_squeeze %285 : memref<1x1x128xf32, #tpu.memory_space<vmem>> -> memref<1x128xf32, #tpu.memory_space<vmem>>
    %287 = tpu.memref_slice %arg9[%c3_i32_209, %c3_i32_192] : memref<4x8x!tpu.dma_semaphore, #tpu.memory_space<semaphore_mem>> -> memref<1x1x!tpu.dma_semaphore, #tpu.memory_space<semaphore_mem>>
    %288 = tpu.memref_squeeze %287 : memref<1x1x!tpu.dma_semaphore, #tpu.memory_space<semaphore_mem>> -> memref<!tpu.dma_semaphore, #tpu.memory_space<semaphore_mem>>
    tpu.wait_dma2 semaphore(%288 : memref<!tpu.dma_semaphore, #tpu.memory_space<semaphore_mem>>) src(%284 : memref<1x128xf32, #tpu.memory_space<any>>) dst(%286 : memref<1x128xf32, #tpu.memory_space<vmem>>)
    %c4_i32_213 = arith.constant 4 : i32
    %c0_i32_214 = arith.constant 0 : i32
    %c0_i32_215 = arith.constant 0 : i32
    %c0_i32_216 = arith.constant 0 : i32
    %c0_i32_217 = arith.constant 0 : i32
    %289 = tpu.memref_slice %arg3[%c0_i32_216, %c0_i32_217] : memref<64x128xf32, #tpu.memory_space<any>> -> memref<1x128xf32, #tpu.memory_space<any>>
    %c0_i32_218 = arith.constant 0 : i32
    %290 = tpu.memref_slice %arg7[%c0_i32_214, %c4_i32_213, %c0_i32_218] : memref<2x8x128xf32, #tpu.memory_space<vmem>> -> memref<1x1x128xf32, #tpu.memory_space<vmem>>
    %291 = tpu.memref_squeeze %290 : memref<1x1x128xf32, #tpu.memory_space<vmem>> -> memref<1x128xf32, #tpu.memory_space<vmem>>
    %292 = tpu.memref_slice %arg9[%c0_i32_215, %c4_i32_213] : memref<4x8x!tpu.dma_semaphore, #tpu.memory_space<semaphore_mem>> -> memref<1x1x!tpu.dma_semaphore, #tpu.memory_space<semaphore_mem>>
    %293 = tpu.memref_squeeze %292 : memref<1x1x!tpu.dma_semaphore, #tpu.memory_space<semaphore_mem>> -> memref<!tpu.dma_semaphore, #tpu.memory_space<semaphore_mem>>
    tpu.wait_dma2 semaphore(%293 : memref<!tpu.dma_semaphore, #tpu.memory_space<semaphore_mem>>) src(%289 : memref<1x128xf32, #tpu.memory_space<any>>) dst(%291 : memref<1x128xf32, #tpu.memory_space<vmem>>)
    %c1_i32_219 = arith.constant 1 : i32
    %c1_i32_220 = arith.constant 1 : i32
    %c0_i32_221 = arith.constant 0 : i32
    %c0_i32_222 = arith.constant 0 : i32
    %294 = tpu.memref_slice %arg4[%c0_i32_221, %c0_i32_222] : memref<64x128xf32, #tpu.memory_space<any>> -> memref<1x128xf32, #tpu.memory_space<any>>
    %c0_i32_223 = arith.constant 0 : i32
    %295 = tpu.memref_slice %arg7[%c1_i32_219, %c4_i32_213, %c0_i32_223] : memref<2x8x128xf32, #tpu.memory_space<vmem>> -> memref<1x1x128xf32, #tpu.memory_space<vmem>>
    %296 = tpu.memref_squeeze %295 : memref<1x1x128xf32, #tpu.memory_space<vmem>> -> memref<1x128xf32, #tpu.memory_space<vmem>>
    %297 = tpu.memref_slice %arg9[%c1_i32_220, %c4_i32_213] : memref<4x8x!tpu.dma_semaphore, #tpu.memory_space<semaphore_mem>> -> memref<1x1x!tpu.dma_semaphore, #tpu.memory_space<semaphore_mem>>
    %298 = tpu.memref_squeeze %297 : memref<1x1x!tpu.dma_semaphore, #tpu.memory_space<semaphore_mem>> -> memref<!tpu.dma_semaphore, #tpu.memory_space<semaphore_mem>>
    tpu.wait_dma2 semaphore(%298 : memref<!tpu.dma_semaphore, #tpu.memory_space<semaphore_mem>>) src(%294 : memref<1x128xf32, #tpu.memory_space<any>>) dst(%296 : memref<1x128xf32, #tpu.memory_space<vmem>>)
    %c0_i32_224 = arith.constant 0 : i32
    %c2_i32_225 = arith.constant 2 : i32
    %c0_i32_226 = arith.constant 0 : i32
    %c0_i32_227 = arith.constant 0 : i32
    %299 = tpu.memref_slice %arg3[%c0_i32_226, %c0_i32_227] : memref<64x128xf32, #tpu.memory_space<any>> -> memref<1x128xf32, #tpu.memory_space<any>>
    %c0_i32_228 = arith.constant 0 : i32
    %300 = tpu.memref_slice %arg8[%c0_i32_224, %c4_i32_213, %c0_i32_228] : memref<2x8x128xf32, #tpu.memory_space<vmem>> -> memref<1x1x128xf32, #tpu.memory_space<vmem>>
    %301 = tpu.memref_squeeze %300 : memref<1x1x128xf32, #tpu.memory_space<vmem>> -> memref<1x128xf32, #tpu.memory_space<vmem>>
    %302 = tpu.memref_slice %arg9[%c2_i32_225, %c4_i32_213] : memref<4x8x!tpu.dma_semaphore, #tpu.memory_space<semaphore_mem>> -> memref<1x1x!tpu.dma_semaphore, #tpu.memory_space<semaphore_mem>>
    %303 = tpu.memref_squeeze %302 : memref<1x1x!tpu.dma_semaphore, #tpu.memory_space<semaphore_mem>> -> memref<!tpu.dma_semaphore, #tpu.memory_space<semaphore_mem>>
    tpu.wait_dma2 semaphore(%303 : memref<!tpu.dma_semaphore, #tpu.memory_space<semaphore_mem>>) src(%299 : memref<1x128xf32, #tpu.memory_space<any>>) dst(%301 : memref<1x128xf32, #tpu.memory_space<vmem>>)
    %c1_i32_229 = arith.constant 1 : i32
    %c3_i32_230 = arith.constant 3 : i32
    %c0_i32_231 = arith.constant 0 : i32
    %c0_i32_232 = arith.constant 0 : i32
    %304 = tpu.memref_slice %arg5[%c0_i32_231, %c0_i32_232] : memref<64x128xf32, #tpu.memory_space<any>> -> memref<1x128xf32, #tpu.memory_space<any>>
    %c0_i32_233 = arith.constant 0 : i32
    %305 = tpu.memref_slice %arg8[%c1_i32_229, %c4_i32_213, %c0_i32_233] : memref<2x8x128xf32, #tpu.memory_space<vmem>> -> memref<1x1x128xf32, #tpu.memory_space<vmem>>
    %306 = tpu.memref_squeeze %305 : memref<1x1x128xf32, #tpu.memory_space<vmem>> -> memref<1x128xf32, #tpu.memory_space<vmem>>
    %307 = tpu.memref_slice %arg9[%c3_i32_230, %c4_i32_213] : memref<4x8x!tpu.dma_semaphore, #tpu.memory_space<semaphore_mem>> -> memref<1x1x!tpu.dma_semaphore, #tpu.memory_space<semaphore_mem>>
    %308 = tpu.memref_squeeze %307 : memref<1x1x!tpu.dma_semaphore, #tpu.memory_space<semaphore_mem>> -> memref<!tpu.dma_semaphore, #tpu.memory_space<semaphore_mem>>
    tpu.wait_dma2 semaphore(%308 : memref<!tpu.dma_semaphore, #tpu.memory_space<semaphore_mem>>) src(%304 : memref<1x128xf32, #tpu.memory_space<any>>) dst(%306 : memref<1x128xf32, #tpu.memory_space<vmem>>)
    %c5_i32_234 = arith.constant 5 : i32
    %c0_i32_235 = arith.constant 0 : i32
    %c0_i32_236 = arith.constant 0 : i32
    %c0_i32_237 = arith.constant 0 : i32
    %c0_i32_238 = arith.constant 0 : i32
    %309 = tpu.memref_slice %arg3[%c0_i32_237, %c0_i32_238] : memref<64x128xf32, #tpu.memory_space<any>> -> memref<1x128xf32, #tpu.memory_space<any>>
    %c0_i32_239 = arith.constant 0 : i32
    %310 = tpu.memref_slice %arg7[%c0_i32_235, %c5_i32_234, %c0_i32_239] : memref<2x8x128xf32, #tpu.memory_space<vmem>> -> memref<1x1x128xf32, #tpu.memory_space<vmem>>
    %311 = tpu.memref_squeeze %310 : memref<1x1x128xf32, #tpu.memory_space<vmem>> -> memref<1x128xf32, #tpu.memory_space<vmem>>
    %312 = tpu.memref_slice %arg9[%c0_i32_236, %c5_i32_234] : memref<4x8x!tpu.dma_semaphore, #tpu.memory_space<semaphore_mem>> -> memref<1x1x!tpu.dma_semaphore, #tpu.memory_space<semaphore_mem>>
    %313 = tpu.memref_squeeze %312 : memref<1x1x!tpu.dma_semaphore, #tpu.memory_space<semaphore_mem>> -> memref<!tpu.dma_semaphore, #tpu.memory_space<semaphore_mem>>
    tpu.wait_dma2 semaphore(%313 : memref<!tpu.dma_semaphore, #tpu.memory_space<semaphore_mem>>) src(%309 : memref<1x128xf32, #tpu.memory_space<any>>) dst(%311 : memref<1x128xf32, #tpu.memory_space<vmem>>)
    %c1_i32_240 = arith.constant 1 : i32
    %c1_i32_241 = arith.constant 1 : i32
    %c0_i32_242 = arith.constant 0 : i32
    %c0_i32_243 = arith.constant 0 : i32
    %314 = tpu.memref_slice %arg4[%c0_i32_242, %c0_i32_243] : memref<64x128xf32, #tpu.memory_space<any>> -> memref<1x128xf32, #tpu.memory_space<any>>
    %c0_i32_244 = arith.constant 0 : i32
    %315 = tpu.memref_slice %arg7[%c1_i32_240, %c5_i32_234, %c0_i32_244] : memref<2x8x128xf32, #tpu.memory_space<vmem>> -> memref<1x1x128xf32, #tpu.memory_space<vmem>>
    %316 = tpu.memref_squeeze %315 : memref<1x1x128xf32, #tpu.memory_space<vmem>> -> memref<1x128xf32, #tpu.memory_space<vmem>>
    %317 = tpu.memref_slice %arg9[%c1_i32_241, %c5_i32_234] : memref<4x8x!tpu.dma_semaphore, #tpu.memory_space<semaphore_mem>> -> memref<1x1x!tpu.dma_semaphore, #tpu.memory_space<semaphore_mem>>
    %318 = tpu.memref_squeeze %317 : memref<1x1x!tpu.dma_semaphore, #tpu.memory_space<semaphore_mem>> -> memref<!tpu.dma_semaphore, #tpu.memory_space<semaphore_mem>>
    tpu.wait_dma2 semaphore(%318 : memref<!tpu.dma_semaphore, #tpu.memory_space<semaphore_mem>>) src(%314 : memref<1x128xf32, #tpu.memory_space<any>>) dst(%316 : memref<1x128xf32, #tpu.memory_space<vmem>>)
    %c0_i32_245 = arith.constant 0 : i32
    %c2_i32_246 = arith.constant 2 : i32
    %c0_i32_247 = arith.constant 0 : i32
    %c0_i32_248 = arith.constant 0 : i32
    %319 = tpu.memref_slice %arg3[%c0_i32_247, %c0_i32_248] : memref<64x128xf32, #tpu.memory_space<any>> -> memref<1x128xf32, #tpu.memory_space<any>>
    %c0_i32_249 = arith.constant 0 : i32
    %320 = tpu.memref_slice %arg8[%c0_i32_245, %c5_i32_234, %c0_i32_249] : memref<2x8x128xf32, #tpu.memory_space<vmem>> -> memref<1x1x128xf32, #tpu.memory_space<vmem>>
    %321 = tpu.memref_squeeze %320 : memref<1x1x128xf32, #tpu.memory_space<vmem>> -> memref<1x128xf32, #tpu.memory_space<vmem>>
    %322 = tpu.memref_slice %arg9[%c2_i32_246, %c5_i32_234] : memref<4x8x!tpu.dma_semaphore, #tpu.memory_space<semaphore_mem>> -> memref<1x1x!tpu.dma_semaphore, #tpu.memory_space<semaphore_mem>>
    %323 = tpu.memref_squeeze %322 : memref<1x1x!tpu.dma_semaphore, #tpu.memory_space<semaphore_mem>> -> memref<!tpu.dma_semaphore, #tpu.memory_space<semaphore_mem>>
    tpu.wait_dma2 semaphore(%323 : memref<!tpu.dma_semaphore, #tpu.memory_space<semaphore_mem>>) src(%319 : memref<1x128xf32, #tpu.memory_space<any>>) dst(%321 : memref<1x128xf32, #tpu.memory_space<vmem>>)
    %c1_i32_250 = arith.constant 1 : i32
    %c3_i32_251 = arith.constant 3 : i32
    %c0_i32_252 = arith.constant 0 : i32
    %c0_i32_253 = arith.constant 0 : i32
    %324 = tpu.memref_slice %arg5[%c0_i32_252, %c0_i32_253] : memref<64x128xf32, #tpu.memory_space<any>> -> memref<1x128xf32, #tpu.memory_space<any>>
    %c0_i32_254 = arith.constant 0 : i32
    %325 = tpu.memref_slice %arg8[%c1_i32_250, %c5_i32_234, %c0_i32_254] : memref<2x8x128xf32, #tpu.memory_space<vmem>> -> memref<1x1x128xf32, #tpu.memory_space<vmem>>
    %326 = tpu.memref_squeeze %325 : memref<1x1x128xf32, #tpu.memory_space<vmem>> -> memref<1x128xf32, #tpu.memory_space<vmem>>
    %327 = tpu.memref_slice %arg9[%c3_i32_251, %c5_i32_234] : memref<4x8x!tpu.dma_semaphore, #tpu.memory_space<semaphore_mem>> -> memref<1x1x!tpu.dma_semaphore, #tpu.memory_space<semaphore_mem>>
    %328 = tpu.memref_squeeze %327 : memref<1x1x!tpu.dma_semaphore, #tpu.memory_space<semaphore_mem>> -> memref<!tpu.dma_semaphore, #tpu.memory_space<semaphore_mem>>
    tpu.wait_dma2 semaphore(%328 : memref<!tpu.dma_semaphore, #tpu.memory_space<semaphore_mem>>) src(%324 : memref<1x128xf32, #tpu.memory_space<any>>) dst(%326 : memref<1x128xf32, #tpu.memory_space<vmem>>)
    %c6_i32_255 = arith.constant 6 : i32
    %c0_i32_256 = arith.constant 0 : i32
    %c0_i32_257 = arith.constant 0 : i32
    %c0_i32_258 = arith.constant 0 : i32
    %c0_i32_259 = arith.constant 0 : i32
    %329 = tpu.memref_slice %arg3[%c0_i32_258, %c0_i32_259] : memref<64x128xf32, #tpu.memory_space<any>> -> memref<1x128xf32, #tpu.memory_space<any>>
    %c0_i32_260 = arith.constant 0 : i32
    %330 = tpu.memref_slice %arg7[%c0_i32_256, %c6_i32_255, %c0_i32_260] : memref<2x8x128xf32, #tpu.memory_space<vmem>> -> memref<1x1x128xf32, #tpu.memory_space<vmem>>
    %331 = tpu.memref_squeeze %330 : memref<1x1x128xf32, #tpu.memory_space<vmem>> -> memref<1x128xf32, #tpu.memory_space<vmem>>
    %332 = tpu.memref_slice %arg9[%c0_i32_257, %c6_i32_255] : memref<4x8x!tpu.dma_semaphore, #tpu.memory_space<semaphore_mem>> -> memref<1x1x!tpu.dma_semaphore, #tpu.memory_space<semaphore_mem>>
    %333 = tpu.memref_squeeze %332 : memref<1x1x!tpu.dma_semaphore, #tpu.memory_space<semaphore_mem>> -> memref<!tpu.dma_semaphore, #tpu.memory_space<semaphore_mem>>
    tpu.wait_dma2 semaphore(%333 : memref<!tpu.dma_semaphore, #tpu.memory_space<semaphore_mem>>) src(%329 : memref<1x128xf32, #tpu.memory_space<any>>) dst(%331 : memref<1x128xf32, #tpu.memory_space<vmem>>)
    %c1_i32_261 = arith.constant 1 : i32
    %c1_i32_262 = arith.constant 1 : i32
    %c0_i32_263 = arith.constant 0 : i32
    %c0_i32_264 = arith.constant 0 : i32
    %334 = tpu.memref_slice %arg4[%c0_i32_263, %c0_i32_264] : memref<64x128xf32, #tpu.memory_space<any>> -> memref<1x128xf32, #tpu.memory_space<any>>
    %c0_i32_265 = arith.constant 0 : i32
    %335 = tpu.memref_slice %arg7[%c1_i32_261, %c6_i32_255, %c0_i32_265] : memref<2x8x128xf32, #tpu.memory_space<vmem>> -> memref<1x1x128xf32, #tpu.memory_space<vmem>>
    %336 = tpu.memref_squeeze %335 : memref<1x1x128xf32, #tpu.memory_space<vmem>> -> memref<1x128xf32, #tpu.memory_space<vmem>>
    %337 = tpu.memref_slice %arg9[%c1_i32_262, %c6_i32_255] : memref<4x8x!tpu.dma_semaphore, #tpu.memory_space<semaphore_mem>> -> memref<1x1x!tpu.dma_semaphore, #tpu.memory_space<semaphore_mem>>
    %338 = tpu.memref_squeeze %337 : memref<1x1x!tpu.dma_semaphore, #tpu.memory_space<semaphore_mem>> -> memref<!tpu.dma_semaphore, #tpu.memory_space<semaphore_mem>>
    tpu.wait_dma2 semaphore(%338 : memref<!tpu.dma_semaphore, #tpu.memory_space<semaphore_mem>>) src(%334 : memref<1x128xf32, #tpu.memory_space<any>>) dst(%336 : memref<1x128xf32, #tpu.memory_space<vmem>>)
    %c0_i32_266 = arith.constant 0 : i32
    %c2_i32_267 = arith.constant 2 : i32
    %c0_i32_268 = arith.constant 0 : i32
    %c0_i32_269 = arith.constant 0 : i32
    %339 = tpu.memref_slice %arg3[%c0_i32_268, %c0_i32_269] : memref<64x128xf32, #tpu.memory_space<any>> -> memref<1x128xf32, #tpu.memory_space<any>>
    %c0_i32_270 = arith.constant 0 : i32
    %340 = tpu.memref_slice %arg8[%c0_i32_266, %c6_i32_255, %c0_i32_270] : memref<2x8x128xf32, #tpu.memory_space<vmem>> -> memref<1x1x128xf32, #tpu.memory_space<vmem>>
    %341 = tpu.memref_squeeze %340 : memref<1x1x128xf32, #tpu.memory_space<vmem>> -> memref<1x128xf32, #tpu.memory_space<vmem>>
    %342 = tpu.memref_slice %arg9[%c2_i32_267, %c6_i32_255] : memref<4x8x!tpu.dma_semaphore, #tpu.memory_space<semaphore_mem>> -> memref<1x1x!tpu.dma_semaphore, #tpu.memory_space<semaphore_mem>>
    %343 = tpu.memref_squeeze %342 : memref<1x1x!tpu.dma_semaphore, #tpu.memory_space<semaphore_mem>> -> memref<!tpu.dma_semaphore, #tpu.memory_space<semaphore_mem>>
    tpu.wait_dma2 semaphore(%343 : memref<!tpu.dma_semaphore, #tpu.memory_space<semaphore_mem>>) src(%339 : memref<1x128xf32, #tpu.memory_space<any>>) dst(%341 : memref<1x128xf32, #tpu.memory_space<vmem>>)
    %c1_i32_271 = arith.constant 1 : i32
    %c3_i32_272 = arith.constant 3 : i32
    %c0_i32_273 = arith.constant 0 : i32
    %c0_i32_274 = arith.constant 0 : i32
    %344 = tpu.memref_slice %arg5[%c0_i32_273, %c0_i32_274] : memref<64x128xf32, #tpu.memory_space<any>> -> memref<1x128xf32, #tpu.memory_space<any>>
    %c0_i32_275 = arith.constant 0 : i32
    %345 = tpu.memref_slice %arg8[%c1_i32_271, %c6_i32_255, %c0_i32_275] : memref<2x8x128xf32, #tpu.memory_space<vmem>> -> memref<1x1x128xf32, #tpu.memory_space<vmem>>
    %346 = tpu.memref_squeeze %345 : memref<1x1x128xf32, #tpu.memory_space<vmem>> -> memref<1x128xf32, #tpu.memory_space<vmem>>
    %347 = tpu.memref_slice %arg9[%c3_i32_272, %c6_i32_255] : memref<4x8x!tpu.dma_semaphore, #tpu.memory_space<semaphore_mem>> -> memref<1x1x!tpu.dma_semaphore, #tpu.memory_space<semaphore_mem>>
    %348 = tpu.memref_squeeze %347 : memref<1x1x!tpu.dma_semaphore, #tpu.memory_space<semaphore_mem>> -> memref<!tpu.dma_semaphore, #tpu.memory_space<semaphore_mem>>
    tpu.wait_dma2 semaphore(%348 : memref<!tpu.dma_semaphore, #tpu.memory_space<semaphore_mem>>) src(%344 : memref<1x128xf32, #tpu.memory_space<any>>) dst(%346 : memref<1x128xf32, #tpu.memory_space<vmem>>)
    %c7_i32_276 = arith.constant 7 : i32
    %c0_i32_277 = arith.constant 0 : i32
    %c0_i32_278 = arith.constant 0 : i32
    %c0_i32_279 = arith.constant 0 : i32
    %c0_i32_280 = arith.constant 0 : i32
    %349 = tpu.memref_slice %arg3[%c0_i32_279, %c0_i32_280] : memref<64x128xf32, #tpu.memory_space<any>> -> memref<1x128xf32, #tpu.memory_space<any>>
    %c0_i32_281 = arith.constant 0 : i32
    %350 = tpu.memref_slice %arg7[%c0_i32_277, %c7_i32_276, %c0_i32_281] : memref<2x8x128xf32, #tpu.memory_space<vmem>> -> memref<1x1x128xf32, #tpu.memory_space<vmem>>
    %351 = tpu.memref_squeeze %350 : memref<1x1x128xf32, #tpu.memory_space<vmem>> -> memref<1x128xf32, #tpu.memory_space<vmem>>
    %352 = tpu.memref_slice %arg9[%c0_i32_278, %c7_i32_276] : memref<4x8x!tpu.dma_semaphore, #tpu.memory_space<semaphore_mem>> -> memref<1x1x!tpu.dma_semaphore, #tpu.memory_space<semaphore_mem>>
    %353 = tpu.memref_squeeze %352 : memref<1x1x!tpu.dma_semaphore, #tpu.memory_space<semaphore_mem>> -> memref<!tpu.dma_semaphore, #tpu.memory_space<semaphore_mem>>
    tpu.wait_dma2 semaphore(%353 : memref<!tpu.dma_semaphore, #tpu.memory_space<semaphore_mem>>) src(%349 : memref<1x128xf32, #tpu.memory_space<any>>) dst(%351 : memref<1x128xf32, #tpu.memory_space<vmem>>)
    %c1_i32_282 = arith.constant 1 : i32
    %c1_i32_283 = arith.constant 1 : i32
    %c0_i32_284 = arith.constant 0 : i32
    %c0_i32_285 = arith.constant 0 : i32
    %354 = tpu.memref_slice %arg4[%c0_i32_284, %c0_i32_285] : memref<64x128xf32, #tpu.memory_space<any>> -> memref<1x128xf32, #tpu.memory_space<any>>
    %c0_i32_286 = arith.constant 0 : i32
    %355 = tpu.memref_slice %arg7[%c1_i32_282, %c7_i32_276, %c0_i32_286] : memref<2x8x128xf32, #tpu.memory_space<vmem>> -> memref<1x1x128xf32, #tpu.memory_space<vmem>>
    %356 = tpu.memref_squeeze %355 : memref<1x1x128xf32, #tpu.memory_space<vmem>> -> memref<1x128xf32, #tpu.memory_space<vmem>>
    %357 = tpu.memref_slice %arg9[%c1_i32_283, %c7_i32_276] : memref<4x8x!tpu.dma_semaphore, #tpu.memory_space<semaphore_mem>> -> memref<1x1x!tpu.dma_semaphore, #tpu.memory_space<semaphore_mem>>
    %358 = tpu.memref_squeeze %357 : memref<1x1x!tpu.dma_semaphore, #tpu.memory_space<semaphore_mem>> -> memref<!tpu.dma_semaphore, #tpu.memory_space<semaphore_mem>>
    tpu.wait_dma2 semaphore(%358 : memref<!tpu.dma_semaphore, #tpu.memory_space<semaphore_mem>>) src(%354 : memref<1x128xf32, #tpu.memory_space<any>>) dst(%356 : memref<1x128xf32, #tpu.memory_space<vmem>>)
    %c0_i32_287 = arith.constant 0 : i32
    %c2_i32_288 = arith.constant 2 : i32
    %c0_i32_289 = arith.constant 0 : i32
    %c0_i32_290 = arith.constant 0 : i32
    %359 = tpu.memref_slice %arg3[%c0_i32_289, %c0_i32_290] : memref<64x128xf32, #tpu.memory_space<any>> -> memref<1x128xf32, #tpu.memory_space<any>>
    %c0_i32_291 = arith.constant 0 : i32
    %360 = tpu.memref_slice %arg8[%c0_i32_287, %c7_i32_276, %c0_i32_291] : memref<2x8x128xf32, #tpu.memory_space<vmem>> -> memref<1x1x128xf32, #tpu.memory_space<vmem>>
    %361 = tpu.memref_squeeze %360 : memref<1x1x128xf32, #tpu.memory_space<vmem>> -> memref<1x128xf32, #tpu.memory_space<vmem>>
    %362 = tpu.memref_slice %arg9[%c2_i32_288, %c7_i32_276] : memref<4x8x!tpu.dma_semaphore, #tpu.memory_space<semaphore_mem>> -> memref<1x1x!tpu.dma_semaphore, #tpu.memory_space<semaphore_mem>>
    %363 = tpu.memref_squeeze %362 : memref<1x1x!tpu.dma_semaphore, #tpu.memory_space<semaphore_mem>> -> memref<!tpu.dma_semaphore, #tpu.memory_space<semaphore_mem>>
    tpu.wait_dma2 semaphore(%363 : memref<!tpu.dma_semaphore, #tpu.memory_space<semaphore_mem>>) src(%359 : memref<1x128xf32, #tpu.memory_space<any>>) dst(%361 : memref<1x128xf32, #tpu.memory_space<vmem>>)
    %c1_i32_292 = arith.constant 1 : i32
    %c3_i32_293 = arith.constant 3 : i32
    %c0_i32_294 = arith.constant 0 : i32
    %c0_i32_295 = arith.constant 0 : i32
    %364 = tpu.memref_slice %arg5[%c0_i32_294, %c0_i32_295] : memref<64x128xf32, #tpu.memory_space<any>> -> memref<1x128xf32, #tpu.memory_space<any>>
    %c0_i32_296 = arith.constant 0 : i32
    %365 = tpu.memref_slice %arg8[%c1_i32_292, %c7_i32_276, %c0_i32_296] : memref<2x8x128xf32, #tpu.memory_space<vmem>> -> memref<1x1x128xf32, #tpu.memory_space<vmem>>
    %366 = tpu.memref_squeeze %365 : memref<1x1x128xf32, #tpu.memory_space<vmem>> -> memref<1x128xf32, #tpu.memory_space<vmem>>
    %367 = tpu.memref_slice %arg9[%c3_i32_293, %c7_i32_276] : memref<4x8x!tpu.dma_semaphore, #tpu.memory_space<semaphore_mem>> -> memref<1x1x!tpu.dma_semaphore, #tpu.memory_space<semaphore_mem>>
    %368 = tpu.memref_squeeze %367 : memref<1x1x!tpu.dma_semaphore, #tpu.memory_space<semaphore_mem>> -> memref<!tpu.dma_semaphore, #tpu.memory_space<semaphore_mem>>
    tpu.wait_dma2 semaphore(%368 : memref<!tpu.dma_semaphore, #tpu.memory_space<semaphore_mem>>) src(%364 : memref<1x128xf32, #tpu.memory_space<any>>) dst(%366 : memref<1x128xf32, #tpu.memory_space<vmem>>)
    %c8_i32_297 = arith.constant 8 : i32
    %c0 = arith.constant 0 : index
    %c0_298 = arith.constant 0 : index
    %c0_299 = arith.constant 0 : index
    %369 = vector.load %arg7[%c0, %c0_298, %c0_299] : memref<2x8x128xf32, #tpu.memory_space<vmem>>, vector<2x8x128xf32>
    %c0_300 = arith.constant 0 : index
    %c0_301 = arith.constant 0 : index
    %c0_302 = arith.constant 0 : index
    %370 = vector.load %arg8[%c0_300, %c0_301, %c0_302] : memref<2x8x128xf32, #tpu.memory_space<vmem>>, vector<2x8x128xf32>
    %371 = arith.mulf %369, %370 : vector<2x8x128xf32>
    %cst = arith.constant dense<0.000000e+00> : vector<2x8xf32>
    %372 = vector.multi_reduction <add>, %371, %cst [2] : vector<2x8x128xf32> to vector<2x8xf32>
    %c0_303 = arith.constant 0 : index
    %c0_304 = arith.constant 0 : index
    %373 = vector.load %arg6[%c0_303, %c0_304] : memref<2x8xf32, #tpu.memory_space<vmem>>, vector<2x8xf32>
    tpu.vector_store %arg6[%c0_303, %c0_304], %372 {strides = array<i32>} : memref<2x8xf32, #tpu.memory_space<vmem>>, vector<2x8xf32>,
    return
  }
  func.func @transform_3(%arg0: i32, %arg1: memref<8xi32, #tpu.memory_space<smem>>, %arg2: memref<8xi32, #tpu.memory_space<smem>>) -> (i32, i32) {
    %c0_i32 = arith.constant 0 : i32
    %c0_i32_0 = arith.constant 0 : i32
    return %c0_i32, %arg0 : i32, i32
  }
}

</mosaic_0001>

<llo_original>
// kernel: tpu_custom_call.1
$region0: #{tpu_custom_call.1}
  #allocation0 [shape = 'u32[]', space=smem, size = 0x4, offset = 0x4, fixed_abs, tag = 'smem constant byte address 0x4 - core index']
  #allocation1 [shape = 'u32[72,128]{1,0:T(1,128)}', space=vmem, size = 0x9000, scoped, tag = 'internal scratch']
  #allocation2 [shape = 'f32[2,8,128]{2,1,0:T(8,128)}', space=vmem, size = 0x2000, scoped, tag = 'scratch operand']
  #allocation3 [shape = 'f32[2,8,128]{2,1,0:T(8,128)}', space=vmem, size = 0x2000, scoped, tag = 'scratch operand']
  #allocation4 [shape = 's32[32]{0}', space=sflag, size = 0x80, scoped, tag = 'scratch operand']
  #allocation5 [shape = 's32[1]{0}', space=sflag, size = 0x4, scoped, tag = 'scoped memory for tpu_custom_call.1']
  #allocation6 [shape = 'u8[512]{0}', space=smem, size = 0x200, scoped, tag = 'prefetched SMEM operand 0']
  #allocation7 [shape = 'u8[512]{0}', space=smem, size = 0x200, scoped, tag = 'prefetched SMEM operand 1']
  #allocation10 [shape = 's32[]', space=sflag, size = 0x4, offset = 0, fixed_abs, tag = 'sflag constant byte address 0x0 - dummy sync flag']
  #allocation11 [shape = 's32[]', space=sflag, size = 0x4, offset = 0, fixed_abs, tag = 'sflag constant byte address 0x0 - dummy sync flag']
  #allocation12 [shape = 'u32[]', space=smem, size = 0x4, offset = 0x44, fixed_abs, tag = 'smem constant byte address 0x44 - assertion arg 0']
  #allocation13 [shape = 'u32[]', space=smem, size = 0x4, offset = 0x48, fixed_abs, tag = 'smem constant byte address 0x48 - assertion arg 1']
  #allocation14 [shape = 's32[]', space=sflag, size = 0x4, offset = 0, fixed_abs, tag = 'sflag constant byte address 0x0 - dummy sync flag']
  #allocation15 [shape = 's32[]', space=sflag, size = 0x4, offset = 0, fixed_abs, tag = 'sflag constant byte address 0x0 - dummy sync flag']
  #allocation16 [shape = 's32[]', space=sflag, size = 0x4, offset = 0, fixed_abs, tag = 'sflag constant byte address 0x0 - dummy sync flag']
  #allocation17 [shape = 's32[]', space=sflag, size = 0x4, offset = 0, fixed_abs, tag = 'sflag constant byte address 0x0 - dummy sync flag']
  #allocation18 [shape = 's32[]', space=sflag, size = 0x4, offset = 0, fixed_abs, tag = 'sflag constant byte address 0x0 - dummy sync flag']
  #allocation19 [shape = 's32[]', space=sflag, size = 0x4, offset = 0, fixed_abs, tag = 'sflag constant byte address 0x0 - dummy sync flag']
  #allocation20 [shape = 's32[]', space=sflag, size = 0x4, offset = 0, fixed_abs, tag = 'sflag constant byte address 0x0 - dummy sync flag']
  #allocation21 [shape = 's32[]', space=sflag, size = 0x4, offset = 0, fixed_abs, tag = 'sflag constant byte address 0x0 - dummy sync flag']
  #allocation22 [shape = 's32[]', space=sflag, size = 0x4, offset = 0, fixed_abs, tag = 'sflag constant byte address 0x0 - dummy sync flag']
  #allocation23 [shape = 's32[]', space=sflag, size = 0x4, offset = 0, fixed_abs, tag = 'sflag constant byte address 0x0 - dummy sync flag']
  #allocation24 [shape = 's32[]', space=sflag, size = 0x4, offset = 0, fixed_abs, tag = 'sflag constant byte address 0x0 - dummy sync flag']
  #allocation25 [shape = 's32[]', space=sflag, size = 0x4, offset = 0, fixed_abs, tag = 'sflag constant byte address 0x0 - dummy sync flag']
  #allocation26 [shape = 's32[]', space=sflag, size = 0x4, offset = 0, fixed_abs, tag = 'sflag constant byte address 0x0 - dummy sync flag']
  #allocation27 [shape = 's32[]', space=sflag, size = 0x4, offset = 0, fixed_abs, tag = 'sflag constant byte address 0x0 - dummy sync flag']
  #allocation28 [shape = 's32[]', space=sflag, size = 0x4, offset = 0, fixed_abs, tag = 'sflag constant byte address 0x0 - dummy sync flag']
  #allocation29 [shape = 's32[]', space=sflag, size = 0x4, offset = 0, fixed_abs, tag = 'sflag constant byte address 0x0 - dummy sync flag']
  #allocation30 [shape = 's32[]', space=sflag, size = 0x4, offset = 0, fixed_abs, tag = 'sflag constant byte address 0x0 - dummy sync flag']
  #allocation31 [shape = 's32[]', space=sflag, size = 0x4, offset = 0, fixed_abs, tag = 'sflag constant byte address 0x0 - dummy sync flag']
  #allocation32 [shape = 's32[]', space=sflag, size = 0x4, offset = 0, fixed_abs, tag = 'sflag constant byte address 0x0 - dummy sync flag']
  #allocation33 [shape = 's32[]', space=sflag, size = 0x4, offset = 0, fixed_abs, tag = 'sflag constant byte address 0x0 - dummy sync flag']
  #allocation34 [shape = 's32[]', space=sflag, size = 0x4, offset = 0, fixed_abs, tag = 'sflag constant byte address 0x0 - dummy sync flag']
  #allocation35 [shape = 's32[]', space=sflag, size = 0x4, offset = 0, fixed_abs, tag = 'sflag constant byte address 0x0 - dummy sync flag']
  #allocation36 [shape = 's32[]', space=sflag, size = 0x4, offset = 0, fixed_abs, tag = 'sflag constant byte address 0x0 - dummy sync flag']
  #allocation37 [shape = 's32[]', space=sflag, size = 0x4, offset = 0, fixed_abs, tag = 'sflag constant byte address 0x0 - dummy sync flag']
  #allocation38 [shape = 's32[]', space=sflag, size = 0x4, offset = 0, fixed_abs, tag = 'sflag constant byte address 0x0 - dummy sync flag']
  #allocation39 [shape = 's32[]', space=sflag, size = 0x4, offset = 0, fixed_abs, tag = 'sflag constant byte address 0x0 - dummy sync flag']
  #allocation40 [shape = 's32[]', space=sflag, size = 0x4, offset = 0, fixed_abs, tag = 'sflag constant byte address 0x0 - dummy sync flag']
  #allocation41 [shape = 's32[]', space=sflag, size = 0x4, offset = 0, fixed_abs, tag = 'sflag constant byte address 0x0 - dummy sync flag']
  #allocation42 [shape = 's32[]', space=sflag, size = 0x4, offset = 0, fixed_abs, tag = 'sflag constant byte address 0x0 - dummy sync flag']
  #allocation43 [shape = 's32[]', space=sflag, size = 0x4, offset = 0, fixed_abs, tag = 'sflag constant byte address 0x0 - dummy sync flag']
  #allocation44 [shape = 's32[]', space=sflag, size = 0x4, offset = 0, fixed_abs, tag = 'sflag constant byte address 0x0 - dummy sync flag']
  #allocation45 [shape = 's32[]', space=sflag, size = 0x4, offset = 0, fixed_abs, tag = 'sflag constant byte address 0x0 - dummy sync flag']
  #allocation46 [shape = 's32[]', space=sflag, size = 0x4, offset = 0, fixed_abs, tag = 'sflag constant byte address 0x0 - dummy sync flag']
  #allocation47 [shape = 's32[]', space=sflag, size = 0x4, offset = 0, fixed_abs, tag = 'sflag constant byte address 0x0 - dummy sync flag']
  #allocation48 [shape = 's32[]', space=sflag, size = 0x4, offset = 0, fixed_abs, tag = 'sflag constant byte address 0x0 - dummy sync flag']
  #allocation49 [shape = 's32[]', space=sflag, size = 0x4, offset = 0, fixed_abs, tag = 'sflag constant byte address 0x0 - dummy sync flag']
  #allocation50 [shape = 's32[]', space=sflag, size = 0x4, offset = 0, fixed_abs, tag = 'sflag constant byte address 0x0 - dummy sync flag']
  #allocation51 [shape = 's32[]', space=sflag, size = 0x4, offset = 0, fixed_abs, tag = 'sflag constant byte address 0x0 - dummy sync flag']
  #allocation52 [shape = 's32[]', space=sflag, size = 0x4, offset = 0, fixed_abs, tag = 'sflag constant byte address 0x0 - dummy sync flag']
  #allocation53 [shape = 's32[]', space=sflag, size = 0x4, offset = 0, fixed_abs, tag = 'sflag constant byte address 0x0 - dummy sync flag']
  #allocation54 [shape = 's32[]', space=sflag, size = 0x4, offset = 0, fixed_abs, tag = 'sflag constant byte address 0x0 - dummy sync flag']
  #allocation55 [shape = 's32[]', space=sflag, size = 0x4, offset = 0, fixed_abs, tag = 'sflag constant byte address 0x0 - dummy sync flag']
  #allocation56 [shape = 's32[]', space=sflag, size = 0x4, offset = 0, fixed_abs, tag = 'sflag constant byte address 0x0 - dummy sync flag']
  #allocation57 [shape = 's32[]', space=sflag, size = 0x4, offset = 0, fixed_abs, tag = 'sflag constant byte address 0x0 - dummy sync flag']
  #allocation58 [shape = 's32[]', space=sflag, size = 0x4, offset = 0, fixed_abs, tag = 'sflag constant byte address 0x0 - dummy sync flag']
  #allocation59 [shape = 's32[]', space=sflag, size = 0x4, offset = 0, fixed_abs, tag = 'sflag constant byte address 0x0 - dummy sync flag']
  #allocation60 [shape = 's32[]', space=sflag, size = 0x4, offset = 0, fixed_abs, tag = 'sflag constant byte address 0x0 - dummy sync flag']
  #allocation61 [shape = 's32[]', space=sflag, size = 0x4, offset = 0, fixed_abs, tag = 'sflag constant byte address 0x0 - dummy sync flag']
  #allocation62 [shape = 's32[]', space=sflag, size = 0x4, offset = 0, fixed_abs, tag = 'sflag constant byte address 0x0 - dummy sync flag']
  #allocation63 [shape = 's32[]', space=sflag, size = 0x4, offset = 0, fixed_abs, tag = 'sflag constant byte address 0x0 - dummy sync flag']
  #allocation64 [shape = 's32[]', space=sflag, size = 0x4, offset = 0, fixed_abs, tag = 'sflag constant byte address 0x0 - dummy sync flag']
  #allocation65 [shape = 's32[]', space=sflag, size = 0x4, offset = 0, fixed_abs, tag = 'sflag constant byte address 0x0 - dummy sync flag']
  #allocation66 [shape = 's32[]', space=sflag, size = 0x4, offset = 0, fixed_abs, tag = 'sflag constant byte address 0x0 - dummy sync flag']
  #allocation67 [shape = 's32[]', space=sflag, size = 0x4, offset = 0, fixed_abs, tag = 'sflag constant byte address 0x0 - dummy sync flag']
  #allocation68 [shape = 's32[]', space=sflag, size = 0x4, offset = 0, fixed_abs, tag = 'sflag constant byte address 0x0 - dummy sync flag']
  #allocation69 [shape = 's32[]', space=sflag, size = 0x4, offset = 0, fixed_abs, tag = 'sflag constant byte address 0x0 - dummy sync flag']
  #allocation70 [shape = 's32[]', space=sflag, size = 0x4, offset = 0, fixed_abs, tag = 'sflag constant byte address 0x0 - dummy sync flag']
  #allocation71 [shape = 's32[]', space=sflag, size = 0x4, offset = 0, fixed_abs, tag = 'sflag constant byte address 0x0 - dummy sync flag']
  #allocation72 [shape = 's32[]', space=sflag, size = 0x4, offset = 0, fixed_abs, tag = 'sflag constant byte address 0x0 - dummy sync flag']
  #allocation73 [shape = 's32[]', space=sflag, size = 0x4, offset = 0, fixed_abs, tag = 'sflag constant byte address 0x0 - dummy sync flag']
  #allocation74 [shape = 's32[]', space=sflag, size = 0x4, offset = 0, fixed_abs, tag = 'sflag constant byte address 0x0 - dummy sync flag']
  #allocation75 [shape = 's32[]', space=sflag, size = 0x4, offset = 0, fixed_abs, tag = 'sflag constant byte address 0x0 - dummy sync flag']
  %s0 = inlined_call_operand.hbm [shape: s32[8], index: 0, kind: input, shape index: {}]
  %s1 = inlined_call_operand.hbm [shape: s32[8], index: 1, kind: input, shape index: {}]
  %s2 = inlined_call_operand.hbm [shape: f32[64,128], index: 2, kind: input, shape index: {}]
  %s3 = inlined_call_operand.hbm [shape: f32[64,128], index: 3, kind: input, shape index: {}]
  %s4 = inlined_call_operand.hbm [shape: f32[64,128], index: 4, kind: input, shape index: {}]
  %s5 = inlined_call_operand.hbm [shape: f32[2,8], index: 5, kind: output, shape index: {}]
  %s6 = sld [smem:[#allocation0]]
  $region138: #{tpu_custom_call.1} parent=0
    _
  %s8 = ssub.s32 1, %s6
  %s9 = scalar_select 0, %s8, %s6
  %s11 = sshll.u32 %s0, 4
  %s12 = int_to_ptr.hbm [resolvable:$true] %s11
  %14 = dma.hbm_to_smem %s12, 16, [#allocation6], [#allocation5]
  %s16 = sshll.u32 %s1, 4
  %s17 = int_to_ptr.hbm [resolvable:$true] %s16
  %19 = dma.hbm_to_smem %s17, 16, [#allocation7], [#allocation5]
  %21 = dma.done [#allocation5], 32
  %22 = sfence
  $region1: #{tpu_custom_call.1} parent=0
    #allocation8 [shape = 'u8[1024]{0}', space=vmem, size = 0x400, scoped, tag = 'output window, operand 0, single buffered']
    #allocation9 [shape = 's32[1]{0}', space=sflag, size = 0x4, scoped, tag = 'scoped memory for tpu_custom_call.1']
    %23 = vsyncpa [#allocation9], 0
    %s24 = smul.u32 0, 8
    %s25 = sld [smem:[#allocation6 + %s24]]
    %s26 = sld [smem:[#allocation7 + %s24]]
    %s27 = scalar_lea.hbm %s2, %s25
    // Predicated region
    $region2: #{tpu_custom_call.1} parent=1 // pred_check
      _
    $region3: #{tpu_custom_call.1} parent=1 // pred_check_branch
      %29 = sbr.rel target = $region5
    $region4: #{tpu_custom_call.1} parent=1 // pred_region
      %30 = sst [smem:[#allocation12]] [#allocation11]
      %31 = sst [smem:[#allocation13]] [#allocation10]
    $region5: #{tpu_custom_call.1} parent=1 // pred_fallthru
      _
    %33 = shalt.err (0)
    %s35 = sshll.u32 %s27, 4
    %s36 = int_to_ptr.hbm [resolvable:$true] %s35
    %s37 = sshll.u32 [#allocation2], 4
    %s38 = int_to_ptr.vmem [resolvable:$true] %s37
    %40 = dma.hbm_to_vmem [thread:$0]  %s36, 16, %s38, [#allocation4]
    %s41 = scalar_lea.hbm %s3, %s25
    %s42 = scalar_lea.vmem [#allocation2], 8
    %s43 = scalar_lea.sflag [#allocation4], 8
    // Predicated region
    $region6: #{tpu_custom_call.1} parent=1 // pred_check
      _
    $region7: #{tpu_custom_call.1} parent=1 // pred_check_branch
      %45 = sbr.rel target = $region9
    $region8: #{tpu_custom_call.1} parent=1 // pred_region
      %46 = sst [smem:[#allocation12]] [#allocation15]
      %47 = sst [smem:[#allocation13]] [#allocation14]
    $region9: #{tpu_custom_call.1} parent=1 // pred_fallthru
      _
    %49 = shalt.err (0)
    %s51 = sshll.u32 %s41, 4
    %s52 = int_to_ptr.hbm [resolvable:$true] %s51
    %s53 = sshll.u32 %s42, 4
    %s54 = int_to_ptr.vmem [resolvable:$true] %s53
    %56 = dma.hbm_to_vmem [thread:$0]  %s52, 16, %s54, %s43
    %s57 = scalar_lea.hbm %s2, %s26
    %s58 = scalar_lea.sflag [#allocation4], 16
    // Predicated region
    $region10: #{tpu_custom_call.1} parent=1 // pred_check
      _
    $region11: #{tpu_custom_call.1} parent=1 // pred_check_branch
      %60 = sbr.rel target = $region13
    $region12: #{tpu_custom_call.1} parent=1 // pred_region
      %61 = sst [smem:[#allocation12]] [#allocation17]
      %62 = sst [smem:[#allocation13]] [#allocation16]
    $region13: #{tpu_custom_call.1} parent=1 // pred_fallthru
      _
    %64 = shalt.err (0)
    %s66 = sshll.u32 %s57, 4
    %s67 = int_to_ptr.hbm [resolvable:$true] %s66
    %s68 = sshll.u32 [#allocation3], 4
    %s69 = int_to_ptr.vmem [resolvable:$true] %s68
    %71 = dma.hbm_to_vmem [thread:$0]  %s67, 16, %s69, %s58
    %s72 = scalar_lea.hbm %s4, %s26
    %s73 = scalar_lea.vmem [#allocation3], 8
    %s74 = scalar_lea.sflag [#allocation4], 24
    // Predicated region
    $region14: #{tpu_custom_call.1} parent=1 // pred_check
      _
    $region15: #{tpu_custom_call.1} parent=1 // pred_check_branch
      %76 = sbr.rel target = $region17
    $region16: #{tpu_custom_call.1} parent=1 // pred_region
      %77 = sst [smem:[#allocation12]] [#allocation19]
      %78 = sst [smem:[#allocation13]] [#allocation18]
    $region17: #{tpu_custom_call.1} parent=1 // pred_fallthru
      _
    %80 = shalt.err (0)
    %s82 = sshll.u32 %s72, 4
    %s83 = int_to_ptr.hbm [resolvable:$true] %s82
    %s84 = sshll.u32 %s73, 4
    %s85 = int_to_ptr.vmem [resolvable:$true] %s84
    %87 = dma.hbm_to_vmem [thread:$0]  %s83, 16, %s85, %s74
    %s88 = sadd.s32 %s24, 1
    %s89 = sld [smem:[#allocation6 + %s88]]
    %s90 = sld [smem:[#allocation7 + %s88]]
    %s91 = scalar_lea.hbm %s2, %s89
    %s92 = scalar_lea.vmem [#allocation2], 1
    %s93 = scalar_lea.sflag [#allocation4], 1
    // Predicated region
    $region18: #{tpu_custom_call.1} parent=1 // pred_check
      _
    $region19: #{tpu_custom_call.1} parent=1 // pred_check_branch
      %95 = sbr.rel target = $region21
    $region20: #{tpu_custom_call.1} parent=1 // pred_region
      %96 = sst [smem:[#allocation12]] [#allocation21]
      %97 = sst [smem:[#allocation13]] [#allocation20]
    $region21: #{tpu_custom_call.1} parent=1 // pred_fallthru
      _
    %99 = shalt.err (0)
    %s101 = sshll.u32 %s91, 4
    %s102 = int_to_ptr.hbm [resolvable:$true] %s101
    %s103 = sshll.u32 %s92, 4
    %s104 = int_to_ptr.vmem [resolvable:$true] %s103
    %106 = dma.hbm_to_vmem [thread:$0]  %s102, 16, %s104, %s93
    %s107 = scalar_lea.hbm %s3, %s89
    %s108 = scalar_lea.vmem [#allocation2], 9
    %s109 = scalar_lea.sflag [#allocation4], 9
    // Predicated region
    $region22: #{tpu_custom_call.1} parent=1 // pred_check
      _
    $region23: #{tpu_custom_call.1} parent=1 // pred_check_branch
      %111 = sbr.rel target = $region25
    $region24: #{tpu_custom_call.1} parent=1 // pred_region
      %112 = sst [smem:[#allocation12]] [#allocation23]
      %113 = sst [smem:[#allocation13]] [#allocation22]
    $region25: #{tpu_custom_call.1} parent=1 // pred_fallthru
      _
    %115 = shalt.err (0)
    %s117 = sshll.u32 %s107, 4
    %s118 = int_to_ptr.hbm [resolvable:$true] %s117
    %s119 = sshll.u32 %s108, 4
    %s120 = int_to_ptr.vmem [resolvable:$true] %s119
    %122 = dma.hbm_to_vmem [thread:$0]  %s118, 16, %s120, %s109
    %s123 = scalar_lea.hbm %s2, %s90
    %s124 = scalar_lea.vmem [#allocation3], 1
    %s125 = scalar_lea.sflag [#allocation4], 17
    // Predicated region
    $region26: #{tpu_custom_call.1} parent=1 // pred_check
      _
    $region27: #{tpu_custom_call.1} parent=1 // pred_check_branch
      %127 = sbr.rel target = $region29
    $region28: #{tpu_custom_call.1} parent=1 // pred_region
      %128 = sst [smem:[#allocation12]] [#allocation25]
      %129 = sst [smem:[#allocation13]] [#allocation24]
    $region29: #{tpu_custom_call.1} parent=1 // pred_fallthru
      _
    %131 = shalt.err (0)
    %s133 = sshll.u32 %s123, 4
    %s134 = int_to_ptr.hbm [resolvable:$true] %s133
    %s135 = sshll.u32 %s124, 4
    %s136 = int_to_ptr.vmem [resolvable:$true] %s135
    %138 = dma.hbm_to_vmem [thread:$0]  %s134, 16, %s136, %s125
    %s139 = scalar_lea.hbm %s4, %s90
    %s140 = scalar_lea.vmem [#allocation3], 9
    %s141 = scalar_lea.sflag [#allocation4], 25
    // Predicated region
    $region30: #{tpu_custom_call.1} parent=1 // pred_check
      _
    $region31: #{tpu_custom_call.1} parent=1 // pred_check_branch
      %143 = sbr.rel target = $region33
    $region32: #{tpu_custom_call.1} parent=1 // pred_region
      %144 = sst [smem:[#allocation12]] [#allocation27]
      %145 = sst [smem:[#allocation13]] [#allocation26]
    $region33: #{tpu_custom_call.1} parent=1 // pred_fallthru
      _
    %147 = shalt.err (0)
    %s149 = sshll.u32 %s139, 4
    %s150 = int_to_ptr.hbm [resolvable:$true] %s149
    %s151 = sshll.u32 %s140, 4
    %s152 = int_to_ptr.vmem [resolvable:$true] %s151
    %154 = dma.hbm_to_vmem [thread:$0]  %s150, 16, %s152, %s141
    %s155 = sadd.s32 %s24, 2
    %s156 = sld [smem:[#allocation6 + %s155]]
    %s157 = sld [smem:[#allocation7 + %s155]]
    %s158 = scalar_lea.hbm %s2, %s156
    %s159 = scalar_lea.vmem [#allocation2], 2
    %s160 = scalar_lea.sflag [#allocation4], 2
    // Predicated region
    $region34: #{tpu_custom_call.1} parent=1 // pred_check
      _
    $region35: #{tpu_custom_call.1} parent=1 // pred_check_branch
      %162 = sbr.rel target = $region37
    $region36: #{tpu_custom_call.1} parent=1 // pred_region
      %163 = sst [smem:[#allocation12]] [#allocation29]
      %164 = sst [smem:[#allocation13]] [#allocation28]
    $region37: #{tpu_custom_call.1} parent=1 // pred_fallthru
      _
    %166 = shalt.err (0)
    %s168 = sshll.u32 %s158, 4
    %s169 = int_to_ptr.hbm [resolvable:$true] %s168
    %s170 = sshll.u32 %s159, 4
    %s171 = int_to_ptr.vmem [resolvable:$true] %s170
    %173 = dma.hbm_to_vmem [thread:$0]  %s169, 16, %s171, %s160
    %s174 = scalar_lea.hbm %s3, %s156
    %s175 = scalar_lea.vmem [#allocation2], 10
    %s176 = scalar_lea.sflag [#allocation4], 10
    // Predicated region
    $region38: #{tpu_custom_call.1} parent=1 // pred_check
      _
    $region39: #{tpu_custom_call.1} parent=1 // pred_check_branch
      %178 = sbr.rel target = $region41
    $region40: #{tpu_custom_call.1} parent=1 // pred_region
      %179 = sst [smem:[#allocation12]] [#allocation31]
      %180 = sst [smem:[#allocation13]] [#allocation30]
    $region41: #{tpu_custom_call.1} parent=1 // pred_fallthru
      _
    %182 = shalt.err (0)
    %s184 = sshll.u32 %s174, 4
    %s185 = int_to_ptr.hbm [resolvable:$true] %s184
    %s186 = sshll.u32 %s175, 4
    %s187 = int_to_ptr.vmem [resolvable:$true] %s186
    %189 = dma.hbm_to_vmem [thread:$0]  %s185, 16, %s187, %s176
    %s190 = scalar_lea.hbm %s2, %s157
    %s191 = scalar_lea.vmem [#allocation3], 2
    %s192 = scalar_lea.sflag [#allocation4], 18
    // Predicated region
    $region42: #{tpu_custom_call.1} parent=1 // pred_check
      _
    $region43: #{tpu_custom_call.1} parent=1 // pred_check_branch
      %194 = sbr.rel target = $region45
    $region44: #{tpu_custom_call.1} parent=1 // pred_region
      %195 = sst [smem:[#allocation12]] [#allocation33]
      %196 = sst [smem:[#allocation13]] [#allocation32]
    $region45: #{tpu_custom_call.1} parent=1 // pred_fallthru
      _
    %198 = shalt.err (0)
    %s200 = sshll.u32 %s190, 4
    %s201 = int_to_ptr.hbm [resolvable:$true] %s200
    %s202 = sshll.u32 %s191, 4
    %s203 = int_to_ptr.vmem [resolvable:$true] %s202
    %205 = dma.hbm_to_vmem [thread:$0]  %s201, 16, %s203, %s192
    %s206 = scalar_lea.hbm %s4, %s157
    %s207 = scalar_lea.vmem [#allocation3], 10
    %s208 = scalar_lea.sflag [#allocation4], 26
    // Predicated region
    $region46: #{tpu_custom_call.1} parent=1 // pred_check
      _
    $region47: #{tpu_custom_call.1} parent=1 // pred_check_branch
      %210 = sbr.rel target = $region49
    $region48: #{tpu_custom_call.1} parent=1 // pred_region
      %211 = sst [smem:[#allocation12]] [#allocation35]
      %212 = sst [smem:[#allocation13]] [#allocation34]
    $region49: #{tpu_custom_call.1} parent=1 // pred_fallthru
      _
    %214 = shalt.err (0)
    %s216 = sshll.u32 %s206, 4
    %s217 = int_to_ptr.hbm [resolvable:$true] %s216
    %s218 = sshll.u32 %s207, 4
    %s219 = int_to_ptr.vmem [resolvable:$true] %s218
    %221 = dma.hbm_to_vmem [thread:$0]  %s217, 16, %s219, %s208
    %s222 = sadd.s32 %s24, 3
    %s223 = sld [smem:[#allocation6 + %s222]]
    %s224 = sld [smem:[#allocation7 + %s222]]
    %s225 = scalar_lea.hbm %s2, %s223
    %s226 = scalar_lea.vmem [#allocation2], 3
    %s227 = scalar_lea.sflag [#allocation4], 3
    // Predicated region
    $region50: #{tpu_custom_call.1} parent=1 // pred_check
      _
    $region51: #{tpu_custom_call.1} parent=1 // pred_check_branch
      %229 = sbr.rel target = $region53
    $region52: #{tpu_custom_call.1} parent=1 // pred_region
      %230 = sst [smem:[#allocation12]] [#allocation37]
      %231 = sst [smem:[#allocation13]] [#allocation36]
    $region53: #{tpu_custom_call.1} parent=1 // pred_fallthru
      _
    %233 = shalt.err (0)
    %s235 = sshll.u32 %s225, 4
    %s236 = int_to_ptr.hbm [resolvable:$true] %s235
    %s237 = sshll.u32 %s226, 4
    %s238 = int_to_ptr.vmem [resolvable:$true] %s237
    %240 = dma.hbm_to_vmem [thread:$0]  %s236, 16, %s238, %s227
    %s241 = scalar_lea.hbm %s3, %s223
    %s242 = scalar_lea.vmem [#allocation2], 11
    %s243 = scalar_lea.sflag [#allocation4], 11
    // Predicated region
    $region54: #{tpu_custom_call.1} parent=1 // pred_check
      _
    $region55: #{tpu_custom_call.1} parent=1 // pred_check_branch
      %245 = sbr.rel target = $region57
    $region56: #{tpu_custom_call.1} parent=1 // pred_region
      %246 = sst [smem:[#allocation12]] [#allocation39]
      %247 = sst [smem:[#allocation13]] [#allocation38]
    $region57: #{tpu_custom_call.1} parent=1 // pred_fallthru
      _
    %249 = shalt.err (0)
    %s251 = sshll.u32 %s241, 4
    %s252 = int_to_ptr.hbm [resolvable:$true] %s251
    %s253 = sshll.u32 %s242, 4
    %s254 = int_to_ptr.vmem [resolvable:$true] %s253
    %256 = dma.hbm_to_vmem [thread:$0]  %s252, 16, %s254, %s243
    %s257 = scalar_lea.hbm %s2, %s224
    %s258 = scalar_lea.vmem [#allocation3], 3
    %s259 = scalar_lea.sflag [#allocation4], 19
    // Predicated region
    $region58: #{tpu_custom_call.1} parent=1 // pred_check
      _
    $region59: #{tpu_custom_call.1} parent=1 // pred_check_branch
      %261 = sbr.rel target = $region61
    $region60: #{tpu_custom_call.1} parent=1 // pred_region
      %262 = sst [smem:[#allocation12]] [#allocation41]
      %263 = sst [smem:[#allocation13]] [#allocation40]
    $region61: #{tpu_custom_call.1} parent=1 // pred_fallthru
      _
    %265 = shalt.err (0)
    %s267 = sshll.u32 %s257, 4
    %s268 = int_to_ptr.hbm [resolvable:$true] %s267
    %s269 = sshll.u32 %s258, 4
    %s270 = int_to_ptr.vmem [resolvable:$true] %s269
    %272 = dma.hbm_to_vmem [thread:$0]  %s268, 16, %s270, %s259
    %s273 = scalar_lea.hbm %s4, %s224
    %s274 = scalar_lea.vmem [#allocation3], 11
    %s275 = scalar_lea.sflag [#allocation4], 27
    // Predicated region
    $region62: #{tpu_custom_call.1} parent=1 // pred_check
      _
    $region63: #{tpu_custom_call.1} parent=1 // pred_check_branch
      %277 = sbr.rel target = $region65
    $region64: #{tpu_custom_call.1} parent=1 // pred_region
      %278 = sst [smem:[#allocation12]] [#allocation43]
      %279 = sst [smem:[#allocation13]] [#allocation42]
    $region65: #{tpu_custom_call.1} parent=1 // pred_fallthru
      _
    %281 = shalt.err (0)
    %s283 = sshll.u32 %s273, 4
    %s284 = int_to_ptr.hbm [resolvable:$true] %s283
    %s285 = sshll.u32 %s274, 4
    %s286 = int_to_ptr.vmem [resolvable:$true] %s285
    %288 = dma.hbm_to_vmem [thread:$0]  %s284, 16, %s286, %s275
    %s289 = sadd.s32 %s24, 4
    %s290 = sld [smem:[#allocation6 + %s289]]
    %s291 = sld [smem:[#allocation7 + %s289]]
    %s292 = scalar_lea.hbm %s2, %s290
    %s293 = scalar_lea.vmem [#allocation2], 4
    %s294 = scalar_lea.sflag [#allocation4], 4
    // Predicated region
    $region66: #{tpu_custom_call.1} parent=1 // pred_check
      _
    $region67: #{tpu_custom_call.1} parent=1 // pred_check_branch
      %296 = sbr.rel target = $region69
    $region68: #{tpu_custom_call.1} parent=1 // pred_region
      %297 = sst [smem:[#allocation12]] [#allocation45]
      %298 = sst [smem:[#allocation13]] [#allocation44]
    $region69: #{tpu_custom_call.1} parent=1 // pred_fallthru
      _
    %300 = shalt.err (0)
    %s302 = sshll.u32 %s292, 4
    %s303 = int_to_ptr.hbm [resolvable:$true] %s302
    %s304 = sshll.u32 %s293, 4
    %s305 = int_to_ptr.vmem [resolvable:$true] %s304
    %307 = dma.hbm_to_vmem [thread:$0]  %s303, 16, %s305, %s294
    %s308 = scalar_lea.hbm %s3, %s290
    %s309 = scalar_lea.vmem [#allocation2], 12
    %s310 = scalar_lea.sflag [#allocation4], 12
    // Predicated region
    $region70: #{tpu_custom_call.1} parent=1 // pred_check
      _
    $region71: #{tpu_custom_call.1} parent=1 // pred_check_branch
      %312 = sbr.rel target = $region73
    $region72: #{tpu_custom_call.1} parent=1 // pred_region
      %313 = sst [smem:[#allocation12]] [#allocation47]
      %314 = sst [smem:[#allocation13]] [#allocation46]
    $region73: #{tpu_custom_call.1} parent=1 // pred_fallthru
      _
    %316 = shalt.err (0)
    %s318 = sshll.u32 %s308, 4
    %s319 = int_to_ptr.hbm [resolvable:$true] %s318
    %s320 = sshll.u32 %s309, 4
    %s321 = int_to_ptr.vmem [resolvable:$true] %s320
    %323 = dma.hbm_to_vmem [thread:$0]  %s319, 16, %s321, %s310
    %s324 = scalar_lea.hbm %s2, %s291
    %s325 = scalar_lea.vmem [#allocation3], 4
    %s326 = scalar_lea.sflag [#allocation4], 20
    // Predicated region
    $region74: #{tpu_custom_call.1} parent=1 // pred_check
      _
    $region75: #{tpu_custom_call.1} parent=1 // pred_check_branch
      %328 = sbr.rel target = $region77
    $region76: #{tpu_custom_call.1} parent=1 // pred_region
      %329 = sst [smem:[#allocation12]] [#allocation49]
      %330 = sst [smem:[#allocation13]] [#allocation48]
    $region77: #{tpu_custom_call.1} parent=1 // pred_fallthru
      _
    %332 = shalt.err (0)
    %s334 = sshll.u32 %s324, 4
    %s335 = int_to_ptr.hbm [resolvable:$true] %s334
    %s336 = sshll.u32 %s325, 4
    %s337 = int_to_ptr.vmem [resolvable:$true] %s336
    %339 = dma.hbm_to_vmem [thread:$0]  %s335, 16, %s337, %s326
    %s340 = scalar_lea.hbm %s4, %s291
    %s341 = scalar_lea.vmem [#allocation3], 12
    %s342 = scalar_lea.sflag [#allocation4], 28
    // Predicated region
    $region78: #{tpu_custom_call.1} parent=1 // pred_check
      _
    $region79: #{tpu_custom_call.1} parent=1 // pred_check_branch
      %344 = sbr.rel target = $region81
    $region80: #{tpu_custom_call.1} parent=1 // pred_region
      %345 = sst [smem:[#allocation12]] [#allocation51]
      %346 = sst [smem:[#allocation13]] [#allocation50]
    $region81: #{tpu_custom_call.1} parent=1 // pred_fallthru
      _
    %348 = shalt.err (0)
    %s350 = sshll.u32 %s340, 4
    %s351 = int_to_ptr.hbm [resolvable:$true] %s350
    %s352 = sshll.u32 %s341, 4
    %s353 = int_to_ptr.vmem [resolvable:$true] %s352
    %355 = dma.hbm_to_vmem [thread:$0]  %s351, 16, %s353, %s342
    %s356 = sadd.s32 %s24, 5
    %s357 = sld [smem:[#allocation6 + %s356]]
    %s358 = sld [smem:[#allocation7 + %s356]]
    %s359 = scalar_lea.hbm %s2, %s357
    %s360 = scalar_lea.vmem [#allocation2], 5
    %s361 = scalar_lea.sflag [#allocation4], 5
    // Predicated region
    $region82: #{tpu_custom_call.1} parent=1 // pred_check
      _
    $region83: #{tpu_custom_call.1} parent=1 // pred_check_branch
      %363 = sbr.rel target = $region85
    $region84: #{tpu_custom_call.1} parent=1 // pred_region
      %364 = sst [smem:[#allocation12]] [#allocation53]
      %365 = sst [smem:[#allocation13]] [#allocation52]
    $region85: #{tpu_custom_call.1} parent=1 // pred_fallthru
      _
    %367 = shalt.err (0)
    %s369 = sshll.u32 %s359, 4
    %s370 = int_to_ptr.hbm [resolvable:$true] %s369
    %s371 = sshll.u32 %s360, 4
    %s372 = int_to_ptr.vmem [resolvable:$true] %s371
    %374 = dma.hbm_to_vmem [thread:$0]  %s370, 16, %s372, %s361
    %s375 = scalar_lea.hbm %s3, %s357
    %s376 = scalar_lea.vmem [#allocation2], 13
    %s377 = scalar_lea.sflag [#allocation4], 13
    // Predicated region
    $region86: #{tpu_custom_call.1} parent=1 // pred_check
      _
    $region87: #{tpu_custom_call.1} parent=1 // pred_check_branch
      %379 = sbr.rel target = $region89
    $region88: #{tpu_custom_call.1} parent=1 // pred_region
      %380 = sst [smem:[#allocation12]] [#allocation55]
      %381 = sst [smem:[#allocation13]] [#allocation54]
    $region89: #{tpu_custom_call.1} parent=1 // pred_fallthru
      _
    %383 = shalt.err (0)
    %s385 = sshll.u32 %s375, 4
    %s386 = int_to_ptr.hbm [resolvable:$true] %s385
    %s387 = sshll.u32 %s376, 4
    %s388 = int_to_ptr.vmem [resolvable:$true] %s387
    %390 = dma.hbm_to_vmem [thread:$0]  %s386, 16, %s388, %s377
    %s391 = scalar_lea.hbm %s2, %s358
    %s392 = scalar_lea.vmem [#allocation3], 5
    %s393 = scalar_lea.sflag [#allocation4], 21
    // Predicated region
    $region90: #{tpu_custom_call.1} parent=1 // pred_check
      _
    $region91: #{tpu_custom_call.1} parent=1 // pred_check_branch
      %395 = sbr.rel target = $region93
    $region92: #{tpu_custom_call.1} parent=1 // pred_region
      %396 = sst [smem:[#allocation12]] [#allocation57]
      %397 = sst [smem:[#allocation13]] [#allocation56]
    $region93: #{tpu_custom_call.1} parent=1 // pred_fallthru
      _
    %399 = shalt.err (0)
    %s401 = sshll.u32 %s391, 4
    %s402 = int_to_ptr.hbm [resolvable:$true] %s401
    %s403 = sshll.u32 %s392, 4
    %s404 = int_to_ptr.vmem [resolvable:$true] %s403
    %406 = dma.hbm_to_vmem [thread:$0]  %s402, 16, %s404, %s393
    %s407 = scalar_lea.hbm %s4, %s358
    %s408 = scalar_lea.vmem [#allocation3], 13
    %s409 = scalar_lea.sflag [#allocation4], 29
    // Predicated region
    $region94: #{tpu_custom_call.1} parent=1 // pred_check
      _
    $region95: #{tpu_custom_call.1} parent=1 // pred_check_branch
      %411 = sbr.rel target = $region97
    $region96: #{tpu_custom_call.1} parent=1 // pred_region
      %412 = sst [smem:[#allocation12]] [#allocation59]
      %413 = sst [smem:[#allocation13]] [#allocation58]
    $region97: #{tpu_custom_call.1} parent=1 // pred_fallthru
      _
    %415 = shalt.err (0)
    %s417 = sshll.u32 %s407, 4
    %s418 = int_to_ptr.hbm [resolvable:$true] %s417
    %s419 = sshll.u32 %s408, 4
    %s420 = int_to_ptr.vmem [resolvable:$true] %s419
    %422 = dma.hbm_to_vmem [thread:$0]  %s418, 16, %s420, %s409
    %s423 = sadd.s32 %s24, 6
    %s424 = sld [smem:[#allocation6 + %s423]]
    %s425 = sld [smem:[#allocation7 + %s423]]
    %s426 = scalar_lea.hbm %s2, %s424
    %s427 = scalar_lea.vmem [#allocation2], 6
    %s428 = scalar_lea.sflag [#allocation4], 6
    // Predicated region
    $region98: #{tpu_custom_call.1} parent=1 // pred_check
      _
    $region99: #{tpu_custom_call.1} parent=1 // pred_check_branch
      %430 = sbr.rel target = $region101
    $region100: #{tpu_custom_call.1} parent=1 // pred_region
      %431 = sst [smem:[#allocation12]] [#allocation61]
      %432 = sst [smem:[#allocation13]] [#allocation60]
    $region101: #{tpu_custom_call.1} parent=1 // pred_fallthru
      _
    %434 = shalt.err (0)
    %s436 = sshll.u32 %s426, 4
    %s437 = int_to_ptr.hbm [resolvable:$true] %s436
    %s438 = sshll.u32 %s427, 4
    %s439 = int_to_ptr.vmem [resolvable:$true] %s438
    %441 = dma.hbm_to_vmem [thread:$0]  %s437, 16, %s439, %s428
    %s442 = scalar_lea.hbm %s3, %s424
    %s443 = scalar_lea.vmem [#allocation2], 14
    %s444 = scalar_lea.sflag [#allocation4], 14
    // Predicated region
    $region102: #{tpu_custom_call.1} parent=1 // pred_check
      _
    $region103: #{tpu_custom_call.1} parent=1 // pred_check_branch
      %446 = sbr.rel target = $region105
    $region104: #{tpu_custom_call.1} parent=1 // pred_region
      %447 = sst [smem:[#allocation12]] [#allocation63]
      %448 = sst [smem:[#allocation13]] [#allocation62]
    $region105: #{tpu_custom_call.1} parent=1 // pred_fallthru
      _
    %450 = shalt.err (0)
    %s452 = sshll.u32 %s442, 4
    %s453 = int_to_ptr.hbm [resolvable:$true] %s452
    %s454 = sshll.u32 %s443, 4
    %s455 = int_to_ptr.vmem [resolvable:$true] %s454
    %457 = dma.hbm_to_vmem [thread:$0]  %s453, 16, %s455, %s444
    %s458 = scalar_lea.hbm %s2, %s425
    %s459 = scalar_lea.vmem [#allocation3], 6
    %s460 = scalar_lea.sflag [#allocation4], 22
    // Predicated region
    $region106: #{tpu_custom_call.1} parent=1 // pred_check
      _
    $region107: #{tpu_custom_call.1} parent=1 // pred_check_branch
      %462 = sbr.rel target = $region109
    $region108: #{tpu_custom_call.1} parent=1 // pred_region
      %463 = sst [smem:[#allocation12]] [#allocation65]
      %464 = sst [smem:[#allocation13]] [#allocation64]
    $region109: #{tpu_custom_call.1} parent=1 // pred_fallthru
      _
    %466 = shalt.err (0)
    %s468 = sshll.u32 %s458, 4
    %s469 = int_to_ptr.hbm [resolvable:$true] %s468
    %s470 = sshll.u32 %s459, 4
    %s471 = int_to_ptr.vmem [resolvable:$true] %s470
    %473 = dma.hbm_to_vmem [thread:$0]  %s469, 16, %s471, %s460
    %s474 = scalar_lea.hbm %s4, %s425
    %s475 = scalar_lea.vmem [#allocation3], 14
    %s476 = scalar_lea.sflag [#allocation4], 30
    // Predicated region
    $region110: #{tpu_custom_call.1} parent=1 // pred_check
      _
    $region111: #{tpu_custom_call.1} parent=1 // pred_check_branch
      %478 = sbr.rel target = $region113
    $region112: #{tpu_custom_call.1} parent=1 // pred_region
      %479 = sst [smem:[#allocation12]] [#allocation67]
      %480 = sst [smem:[#allocation13]] [#allocation66]
    $region113: #{tpu_custom_call.1} parent=1 // pred_fallthru
      _
    %482 = shalt.err (0)
    %s484 = sshll.u32 %s474, 4
    %s485 = int_to_ptr.hbm [resolvable:$true] %s484
    %s486 = sshll.u32 %s475, 4
    %s487 = int_to_ptr.vmem [resolvable:$true] %s486
    %489 = dma.hbm_to_vmem [thread:$0]  %s485, 16, %s487, %s476
    %s490 = sadd.s32 %s24, 7
    %s491 = sld [smem:[#allocation6 + %s490]]
    %s492 = sld [smem:[#allocation7 + %s490]]
    %s493 = scalar_lea.hbm %s2, %s491
    %s494 = scalar_lea.vmem [#allocation2], 7
    %s495 = scalar_lea.sflag [#allocation4], 7
    // Predicated region
    $region114: #{tpu_custom_call.1} parent=1 // pred_check
      _
    $region115: #{tpu_custom_call.1} parent=1 // pred_check_branch
      %497 = sbr.rel target = $region117
    $region116: #{tpu_custom_call.1} parent=1 // pred_region
      %498 = sst [smem:[#allocation12]] [#allocation69]
      %499 = sst [smem:[#allocation13]] [#allocation68]
    $region117: #{tpu_custom_call.1} parent=1 // pred_fallthru
      _
    %501 = shalt.err (0)
    %s503 = sshll.u32 %s493, 4
    %s504 = int_to_ptr.hbm [resolvable:$true] %s503
    %s505 = sshll.u32 %s494, 4
    %s506 = int_to_ptr.vmem [resolvable:$true] %s505
    %508 = dma.hbm_to_vmem [thread:$0]  %s504, 16, %s506, %s495
    %s509 = scalar_lea.hbm %s3, %s491
    %s510 = scalar_lea.vmem [#allocation2], 15
    %s511 = scalar_lea.sflag [#allocation4], 15
    // Predicated region
    $region118: #{tpu_custom_call.1} parent=1 // pred_check
      _
    $region119: #{tpu_custom_call.1} parent=1 // pred_check_branch
      %513 = sbr.rel target = $region121
    $region120: #{tpu_custom_call.1} parent=1 // pred_region
      %514 = sst [smem:[#allocation12]] [#allocation71]
      %515 = sst [smem:[#allocation13]] [#allocation70]
    $region121: #{tpu_custom_call.1} parent=1 // pred_fallthru
      _
    %517 = shalt.err (0)
    %s519 = sshll.u32 %s509, 4
    %s520 = int_to_ptr.hbm [resolvable:$true] %s519
    %s521 = sshll.u32 %s510, 4
    %s522 = int_to_ptr.vmem [resolvable:$true] %s521
    %524 = dma.hbm_to_vmem [thread:$0]  %s520, 16, %s522, %s511
    %s525 = scalar_lea.hbm %s2, %s492
    %s526 = scalar_lea.vmem [#allocation3], 7
    %s527 = scalar_lea.sflag [#allocation4], 23
    // Predicated region
    $region122: #{tpu_custom_call.1} parent=1 // pred_check
      _
    $region123: #{tpu_custom_call.1} parent=1 // pred_check_branch
      %529 = sbr.rel target = $region125
    $region124: #{tpu_custom_call.1} parent=1 // pred_region
      %530 = sst [smem:[#allocation12]] [#allocation73]
      %531 = sst [smem:[#allocation13]] [#allocation72]
    $region125: #{tpu_custom_call.1} parent=1 // pred_fallthru
      _
    %533 = shalt.err (0)
    %s535 = sshll.u32 %s525, 4
    %s536 = int_to_ptr.hbm [resolvable:$true] %s535
    %s537 = sshll.u32 %s526, 4
    %s538 = int_to_ptr.vmem [resolvable:$true] %s537
    %540 = dma.hbm_to_vmem [thread:$0]  %s536, 16, %s538, %s527
    %s541 = scalar_lea.hbm %s4, %s492
    %s542 = scalar_lea.vmem [#allocation3], 15
    %s543 = scalar_lea.sflag [#allocation4], 31
    // Predicated region
    $region126: #{tpu_custom_call.1} parent=1 // pred_check
      _
    $region127: #{tpu_custom_call.1} parent=1 // pred_check_branch
      %545 = sbr.rel target = $region129
    $region128: #{tpu_custom_call.1} parent=1 // pred_region
      %546 = sst [smem:[#allocation12]] [#allocation75]
      %547 = sst [smem:[#allocation13]] [#allocation74]
    $region129: #{tpu_custom_call.1} parent=1 // pred_fallthru
      _
    %549 = shalt.err (0)
    %s551 = sshll.u32 %s541, 4
    %s552 = int_to_ptr.hbm [resolvable:$true] %s551
    %s553 = sshll.u32 %s542, 4
    %s554 = int_to_ptr.vmem [resolvable:$true] %s553
    %556 = dma.hbm_to_vmem [thread:$0]  %s552, 16, %s554, %s543
    %s557 = smul.u32 1, 1
    %s558 = sshll.u32 %s557, 4
    %559 = dma.done [#allocation4], %s558
    %s560 = sshll.u32 %s557, 4
    %561 = dma.done %s43, %s560
    %s562 = sshll.u32 %s557, 4
    %563 = dma.done %s58, %s562
    %s564 = sshll.u32 %s557, 4
    %565 = dma.done %s74, %s564
    %s566 = sshll.u32 %s557, 4
    %567 = dma.done %s93, %s566
    %s568 = sshll.u32 %s557, 4
    %569 = dma.done %s109, %s568
    %s570 = sshll.u32 %s557, 4
    %571 = dma.done %s125, %s570
    %s572 = sshll.u32 %s557, 4
    %573 = dma.done %s141, %s572
    %s574 = sshll.u32 %s557, 4
    %575 = dma.done %s160, %s574
    %s576 = sshll.u32 %s557, 4
    %577 = dma.done %s176, %s576
    %s578 = sshll.u32 %s557, 4
    %579 = dma.done %s192, %s578
    %s580 = sshll.u32 %s557, 4
    %581 = dma.done %s208, %s580
    %s582 = sshll.u32 %s557, 4
    %583 = dma.done %s227, %s582
    %s584 = sshll.u32 %s557, 4
    %585 = dma.done %s243, %s584
    %s586 = sshll.u32 %s557, 4
    %587 = dma.done %s259, %s586
    %s588 = sshll.u32 %s557, 4
    %589 = dma.done %s275, %s588
    %s590 = sshll.u32 %s557, 4
    %591 = dma.done %s294, %s590
    %s592 = sshll.u32 %s557, 4
    %593 = dma.done %s310, %s592
    %s594 = sshll.u32 %s557, 4
    %595 = dma.done %s326, %s594
    %s596 = sshll.u32 %s557, 4
    %597 = dma.done %s342, %s596
    %s598 = sshll.u32 %s557, 4
    %599 = dma.done %s361, %s598
    %s600 = sshll.u32 %s557, 4
    %601 = dma.done %s377, %s600
    %s602 = sshll.u32 %s557, 4
    %603 = dma.done %s393, %s602
    %s604 = sshll.u32 %s557, 4
    %605 = dma.done %s409, %s604
    %s606 = sshll.u32 %s557, 4
    %607 = dma.done %s428, %s606
    %s608 = sshll.u32 %s557, 4
    %609 = dma.done %s444, %s608
    %s610 = sshll.u32 %s557, 4
    %611 = dma.done %s460, %s610
    %s612 = sshll.u32 %s557, 4
    %613 = dma.done %s476, %s612
    %s614 = sshll.u32 %s557, 4
    %615 = dma.done %s495, %s614
    %s616 = sshll.u32 %s557, 4
    %617 = dma.done %s511, %s616
    %s618 = sshll.u32 %s557, 4
    %619 = dma.done %s527, %s618
    %s620 = sshll.u32 %s557, 4
    %621 = dma.done %s543, %s620
    %v622 = vld [vmem:[#allocation2] sm:$0xff]
    %v623 = vld [vmem:[#allocation2 + $0x8] sm:$0xff]
    %v624 = vld [vmem:[#allocation3] sm:$0xff]
    %v625 = vld [vmem:[#allocation3 + $0x8] sm:$0xff]
    %v626 = vmul.f32 %v622, %v624
    %v627 = vmul.f32 %v623, %v625
    %628 = vadd.xlane.f32.xlu0 %v626
    %v629 = vpop.xlane.xlu0 %628
    %630 = vadd.xlane.f32.xlu0 %v627
    %v631 = vpop.xlane.xlu0 %630
    %v634 = vlaneseq
    %v635 = vand.u32 %v634, 127
    %v636 = vperm.slane %v629, %v635
    %v637 = vperm.slane %v631, %v635
    %vm638 = vcmask 1041409
    %v639 = vsel %vm638, %v637, %v636
    %vm641 = vcmask 58368
    %642 = vst.msk [vmem:[#allocation8] sm:$0x3] %vm641, %v639
    // Predicated region
    $region130: #{tpu_custom_call.1} parent=1 // pred_check
      _
    $region131: #{tpu_custom_call.1} parent=1 // pred_check_branch
      %644 = sbr.rel (0) target = $region133
    $region132: #{tpu_custom_call.1} parent=1 // pred_region
      %646 = vsyncadd [#allocation9], 0
      %s648 = sshll.u32 [#allocation8], 4
      %s649 = int_to_ptr.vmem [resolvable:$true] %s648
      %s650 = sshll.u32 %s5, 4
      %s651 = int_to_ptr.hbm [resolvable:$true] %s650
      %653 = dma.vmem_to_hbm [thread:$0]  %s649, 32, %s651, [#allocation9]
    $region133: #{tpu_custom_call.1} parent=1 // pred_fallthru
      _
    // Predicated region
    $region134: #{tpu_custom_call.1} parent=1 // pred_check
      _
    $region135: #{tpu_custom_call.1} parent=1 // pred_check_branch
      %655 = sbr.rel (0) target = $region137
    $region136: #{tpu_custom_call.1} parent=1 // pred_region
      %657 = dma.done [#allocation9], 32
    $region137: #{tpu_custom_call.1} parent=1 // pred_fallthru
      _
    %658 = vsyncpa [#allocation9], 1
  %659 = vsyncmov [#allocation4]
  %s660 = vpop.sfrf %659
  %p661 = scmp.eq.s32.totalorder %s660, 0
  %p662 = pneg %p661
  %664 = shalt.err (%p662)
  %s665 = scalar_lea.sflag [#allocation4], 1
  %666 = vsyncmov %s665
  %s667 = vpop.sfrf %666
  %p668 = scmp.eq.s32.totalorder %s667, 0
  %p669 = pneg %p668
  %671 = shalt.err (%p669)
  %s672 = scalar_lea.sflag [#allocation4], 2
  %673 = vsyncmov %s672
  %s674 = vpop.sfrf %673
  %p675 = scmp.eq.s32.totalorder %s674, 0
  %p676 = pneg %p675
  %678 = shalt.err (%p676)
  %s679 = scalar_lea.sflag [#allocation4], 3
  %680 = vsyncmov %s679
  %s681 = vpop.sfrf %680
  %p682 = scmp.eq.s32.totalorder %s681, 0
  %p683 = pneg %p682
  %685 = shalt.err (%p683)
  %s686 = scalar_lea.sflag [#allocation4], 4
  %687 = vsyncmov %s686
  %s688 = vpop.sfrf %687
  %p689 = scmp.eq.s32.totalorder %s688, 0
  %p690 = pneg %p689
  %692 = shalt.err (%p690)
  %s693 = scalar_lea.sflag [#allocation4], 5
  %694 = vsyncmov %s693
  %s695 = vpop.sfrf %694
  %p696 = scmp.eq.s32.totalorder %s695, 0
  %p697 = pneg %p696
  %699 = shalt.err (%p697)
  %s700 = scalar_lea.sflag [#allocation4], 6
  %701 = vsyncmov %s700
  %s702 = vpop.sfrf %701
  %p703 = scmp.eq.s32.totalorder %s702, 0
  %p704 = pneg %p703
  %706 = shalt.err (%p704)
  %s707 = scalar_lea.sflag [#allocation4], 7
  %708 = vsyncmov %s707
  %s709 = vpop.sfrf %708
  %p710 = scmp.eq.s32.totalorder %s709, 0
  %p711 = pneg %p710
  %713 = shalt.err (%p711)
  %s714 = scalar_lea.sflag [#allocation4], 8
  %715 = vsyncmov %s714
  %s716 = vpop.sfrf %715
  %p717 = scmp.eq.s32.totalorder %s716, 0
  %p718 = pneg %p717
  %720 = shalt.err (%p718)
  %s721 = scalar_lea.sflag [#allocation4], 9
  %722 = vsyncmov %s721
  %s723 = vpop.sfrf %722
  %p724 = scmp.eq.s32.totalorder %s723, 0
  %p725 = pneg %p724
  %727 = shalt.err (%p725)
  %s728 = scalar_lea.sflag [#allocation4], 10
  %729 = vsyncmov %s728
  %s730 = vpop.sfrf %729
  %p731 = scmp.eq.s32.totalorder %s730, 0
  %p732 = pneg %p731
  %734 = shalt.err (%p732)
  %s735 = scalar_lea.sflag [#allocation4], 11
  %736 = vsyncmov %s735
  %s737 = vpop.sfrf %736
  %p738 = scmp.eq.s32.totalorder %s737, 0
  %p739 = pneg %p738
  %741 = shalt.err (%p739)
  %s742 = scalar_lea.sflag [#allocation4], 12
  %743 = vsyncmov %s742
  %s744 = vpop.sfrf %743
  %p745 = scmp.eq.s32.totalorder %s744, 0
  %p746 = pneg %p745
  %748 = shalt.err (%p746)
  %s749 = scalar_lea.sflag [#allocation4], 13
  %750 = vsyncmov %s749
  %s751 = vpop.sfrf %750
  %p752 = scmp.eq.s32.totalorder %s751, 0
  %p753 = pneg %p752
  %755 = shalt.err (%p753)
  %s756 = scalar_lea.sflag [#allocation4], 14
  %757 = vsyncmov %s756
  %s758 = vpop.sfrf %757
  %p759 = scmp.eq.s32.totalorder %s758, 0
  %p760 = pneg %p759
  %762 = shalt.err (%p760)
  %s763 = scalar_lea.sflag [#allocation4], 15
  %764 = vsyncmov %s763
  %s765 = vpop.sfrf %764
  %p766 = scmp.eq.s32.totalorder %s765, 0
  %p767 = pneg %p766
  %769 = shalt.err (%p767)
  %s770 = scalar_lea.sflag [#allocation4], 16
  %771 = vsyncmov %s770
  %s772 = vpop.sfrf %771
  %p773 = scmp.eq.s32.totalorder %s772, 0
  %p774 = pneg %p773
  %776 = shalt.err (%p774)
  %s777 = scalar_lea.sflag [#allocation4], 17
  %778 = vsyncmov %s777
  %s779 = vpop.sfrf %778
  %p780 = scmp.eq.s32.totalorder %s779, 0
  %p781 = pneg %p780
  %783 = shalt.err (%p781)
  %s784 = scalar_lea.sflag [#allocation4], 18
  %785 = vsyncmov %s784
  %s786 = vpop.sfrf %785
  %p787 = scmp.eq.s32.totalorder %s786, 0
  %p788 = pneg %p787
  %790 = shalt.err (%p788)
  %s791 = scalar_lea.sflag [#allocation4], 19
  %792 = vsyncmov %s791
  %s793 = vpop.sfrf %792
  %p794 = scmp.eq.s32.totalorder %s793, 0
  %p795 = pneg %p794
  %797 = shalt.err (%p795)
  %s798 = scalar_lea.sflag [#allocation4], 20
  %799 = vsyncmov %s798
  %s800 = vpop.sfrf %799
  %p801 = scmp.eq.s32.totalorder %s800, 0
  %p802 = pneg %p801
  %804 = shalt.err (%p802)
  %s805 = scalar_lea.sflag [#allocation4], 21
  %806 = vsyncmov %s805
  %s807 = vpop.sfrf %806
  %p808 = scmp.eq.s32.totalorder %s807, 0
  %p809 = pneg %p808
  %811 = shalt.err (%p809)
  %s812 = scalar_lea.sflag [#allocation4], 22
  %813 = vsyncmov %s812
  %s814 = vpop.sfrf %813
  %p815 = scmp.eq.s32.totalorder %s814, 0
  %p816 = pneg %p815
  %818 = shalt.err (%p816)
  %s819 = scalar_lea.sflag [#allocation4], 23
  %820 = vsyncmov %s819
  %s821 = vpop.sfrf %820
  %p822 = scmp.eq.s32.totalorder %s821, 0
  %p823 = pneg %p822
  %825 = shalt.err (%p823)
  %s826 = scalar_lea.sflag [#allocation4], 24
  %827 = vsyncmov %s826
  %s828 = vpop.sfrf %827
  %p829 = scmp.eq.s32.totalorder %s828, 0
  %p830 = pneg %p829
  %832 = shalt.err (%p830)
  %s833 = scalar_lea.sflag [#allocation4], 25
  %834 = vsyncmov %s833
  %s835 = vpop.sfrf %834
  %p836 = scmp.eq.s32.totalorder %s835, 0
  %p837 = pneg %p836
  %839 = shalt.err (%p837)
  %s840 = scalar_lea.sflag [#allocation4], 26
  %841 = vsyncmov %s840
  %s842 = vpop.sfrf %841
  %p843 = scmp.eq.s32.totalorder %s842, 0
  %p844 = pneg %p843
  %846 = shalt.err (%p844)
  %s847 = scalar_lea.sflag [#allocation4], 27
  %848 = vsyncmov %s847
  %s849 = vpop.sfrf %848
  %p850 = scmp.eq.s32.totalorder %s849, 0
  %p851 = pneg %p850
  %853 = shalt.err (%p851)
  %s854 = scalar_lea.sflag [#allocation4], 28
  %855 = vsyncmov %s854
  %s856 = vpop.sfrf %855
  %p857 = scmp.eq.s32.totalorder %s856, 0
  %p858 = pneg %p857
  %860 = shalt.err (%p858)
  %s861 = scalar_lea.sflag [#allocation4], 29
  %862 = vsyncmov %s861
  %s863 = vpop.sfrf %862
  %p864 = scmp.eq.s32.totalorder %s863, 0
  %p865 = pneg %p864
  %867 = shalt.err (%p865)
  %s868 = scalar_lea.sflag [#allocation4], 30
  %869 = vsyncmov %s868
  %s870 = vpop.sfrf %869
  %p871 = scmp.eq.s32.totalorder %s870, 0
  %p872 = pneg %p871
  %874 = shalt.err (%p872)
  %s875 = scalar_lea.sflag [#allocation4], 31
  %876 = vsyncmov %s875
  %s877 = vpop.sfrf %876
  %p878 = scmp.eq.s32.totalorder %s877, 0
  %p879 = pneg %p878
  %881 = shalt.err (%p879)

</llo_original>
